<compile_context>
chip_gen: v5e
topology: v5e:2x2
jax: 0.10.0
libtpu: 0.0.40
codegen_flags: <defaults>
</compile_context>

<pallas_src>
import functools

import jax
import jax.numpy as jnp
import numpy as np
from jax import lax
from jax.experimental import pallas as pl
from jax.experimental.pallas import tpu as pltpu


def _round_up(x, m):
    return ((x + m - 1) // m) * m


def adder_sad_kernel(x_ref, w_ref, o_ref, acc_ref, *, tc, tm, ms, n_strips, n_blk):
    # x_ref:   (tm, tk)        im2col patch tile, K (taps) on lanes, f32
    # w_ref:   (tc, tk)        weight tile, one sublane row per output channel
    # o_ref:   (1, tm, tc)     output tile (negative SAD), f32
    # acc_ref: (tc*tm, 128)    per-channel lane-wise partial sums, f32 scratch
    k_idx = pl.program_id(2)

    @pl.when(k_idx == 0)
    def _init():
        acc_ref[...] = jnp.zeros_like(acc_ref)

    def chan_body(c, carry):
        # (1, tk) weight row for channel c: sublane broadcast against the
        # patch strips is cheap (one splat vreg reused for all row blocks).
        w_row = w_ref[pl.ds(c, 1), :]
        acc_base = c * tm

        def strip_body(s, carry2):
            r0 = pl.multiple_of(s * ms, ms)
            # Slice the ref directly (no full-tile value preload); accumulate
            # the tk/128 lane blocks of |x - w| into a single (ms, 128) strip.
            d = jnp.abs(x_ref[pl.ds(r0, ms), 0:128] - w_row[:, 0:128])
            for b in range(1, n_blk):          # static, small
                d = d + jnp.abs(x_ref[pl.ds(r0, ms), b * 128:(b + 1) * 128]
                                - w_row[:, b * 128:(b + 1) * 128])
            a0 = pl.multiple_of(acc_base + r0, ms)
            acc_ref[pl.ds(a0, ms), :] = acc_ref[pl.ds(a0, ms), :] + d
            return carry2

        # Strip-mining bounds the live vreg set; unroll=2 keeps LLO visibility.
        return lax.fori_loop(0, n_strips, strip_body, carry, unroll=2)

    lax.fori_loop(0, tc, chan_body, 0)

    @pl.when(k_idx == pl.num_programs(2) - 1)
    def _finalize():
        # Cross-lane (XLU) reduction happens once per output tile, not per tap.
        for c in range(tc):                    # static, tc <= 16
            col = jnp.sum(acc_ref[c * tm:(c + 1) * tm, :], axis=1, keepdims=True)
            o_ref[0, :, c:c + 1] = -col


def _im2col_nchw(x, kh, kw, stride, padding):
    """x: (N, C, H, W) -> patches (N, Ho, Wo, C*kh*kw), taps ordered (C, kh, kw)."""
    if padding > 0:
        x = jnp.pad(x, ((0, 0), (0, 0), (padding, padding), (padding, padding)))
    N, C, H, W = x.shape
    Ho = (H - kh) // stride + 1
    Wo = (W - kw) // stride + 1
    taps = []
    for i in range(kh):
        for j in range(kw):
            taps.append(x[:, :, i:i + (Ho - 1) * stride + 1:stride,
                              j:j + (Wo - 1) * stride + 1:stride])  # (N, C, Ho, Wo)
    p = jnp.stack(taps, axis=0)          # (kh*kw, N, C, Ho, Wo)
    p = p.transpose(1, 3, 4, 2, 0)       # (N, Ho, Wo, C, kh*kw)
    p = p.reshape(N, Ho, Wo, C * kh * kw)
    return p, Ho, Wo


@functools.partial(jax.jit, static_argnames=("stride", "padding"))
def adder2d_forward(x, weight, stride=1, padding=0, bias=None):
    """AdderNet 2D forward.  x: (N, Ci, H, W), weight: (Co, Ci, kh, kw) -> (N, Co, Ho, Wo)."""
    N, Ci, H, W = x.shape
    Co, Ci_w, kh, kw = weight.shape
    assert Ci == Ci_w

    patches, Ho, Wo = _im2col_nchw(x, kh, kw, stride, padding)   # (N, Ho, Wo, K)
    K = Ci * kh * kw
    P = N * Ho * Wo
    patches = patches.reshape(P, K).astype(jnp.float32)
    w2 = weight.reshape(Co, K).astype(jnp.float32)               # (Co, K)

    # ---- K (reduction) axis: pad to lanes; chunk with a divisor of K_pad so
    # there is no per-chunk padding waste.  Zero-padding BOTH x and w keeps the
    # result exact (|0 - 0| = 0).
    K_pad = _round_up(K, 128)
    kb = K_pad // 128
    db = max(d for d in range(1, min(kb, 8) + 1) if kb % d == 0)
    tk = db * 128                         # up to 1024 lanes per chunk
    n_blk = tk // 128

    # ---- output channels: small sublane tile looped inside the kernel.
    # No padding of Co to 128 lanes -> no lane waste for small Co.
    tc = min(16, _round_up(Co, 8))
    Co_pad = _round_up(Co, tc)

    # ---- rows (N*Ho*Wo): big sublane tile, strip-mined in-kernel.
    if P >= 128:
        tm = min(512, _round_up(P, 128))
        # v7x has 2 TensorCores: keep >= 2 steps on the parallel grid axes.
        if (Co_pad // tc) * ((P + tm - 1) // tm) < 2 and tm > 128:
            tm = _round_up((P + 1) // 2, 128)
    else:
        tm = _round_up(P, 8)
    ms = min(128, tm)                     # sublane strip rows (tm % ms == 0)
    n_strips = tm // ms
    P_pad = _round_up(P, tm)

    if (P_pad, K_pad) != (P, K):
        patches = jnp.pad(patches, ((0, P_pad - P), (0, K_pad - K)))
    if (Co_pad, K_pad) != (Co, K):
        w2 = jnp.pad(w2, ((0, Co_pad - Co), (0, K_pad - K)))

    n_pt, n_ct, n_kt = P_pad // tm, Co_pad // tc, K_pad // tk

    cost = pl.CostEstimate(
        flops=3 * P_pad * K_pad * Co_pad,        # sub + abs + add, all VPU
        transcendentals=0,
        bytes_accessed=(n_ct * P_pad * K_pad * 4     # patches re-streamed per channel tile
                        + Co_pad * K_pad * 4
                        + P_pad * Co_pad * 4),
    )

    kernel = functools.partial(adder_sad_kernel, tc=tc, tm=tm, ms=ms,
                               n_strips=n_strips, n_blk=n_blk)

    # Output laid out as (channel_tile, P_pad, tc) so the block's last dim
    # always equals the full array dim (valid tiling for any Co).
    out3 = pl.pallas_call(
        kernel,
        out_shape=jax.ShapeDtypeStruct((n_ct, P_pad, tc), jnp.float32),
        grid_spec=pltpu.PrefetchScalarGridSpec(
            num_scalar_prefetch=0,
            grid=(n_pt, n_ct, n_kt),
            in_specs=[
                pl.BlockSpec((tm, tk), lambda i, j, k: (i, k)),    # patch tile
                pl.BlockSpec((tc, tk), lambda i, j, k: (j, k)),    # weight rows
            ],
            out_specs=pl.BlockSpec((1, tm, tc), lambda i, j, k: (j, i, 0)),
            scratch_shapes=[pltpu.VMEM((tc * tm, 128), jnp.float32)],
        ),
        compiler_params=pltpu.CompilerParams(
            dimension_semantics=("parallel", "parallel", "arbitrary")),
        cost_estimate=cost,
    )(patches, w2)

    # (n_ct, P_pad, tc) -> (P, Co) -> (N, Co, Ho, Wo)
    out_flat = out3.transpose(1, 0, 2).reshape(P_pad, Co_pad)[:P, :Co]
    out = out_flat.reshape(N, Ho, Wo, Co).transpose(0, 3, 1, 2)
    if bias is not None:
        out = out + bias[None, :, None, None]
    return out


if __name__ == "__main__":
    # Module config: adder2d(input_channel=4, output_channel=8, kernel_size=3,
    #                        stride=1, padding=1, bias=False)
    N, Ci, H, W = 2, 4, 16, 16
    Co, ksize, stride, padding = 8, 3, 1, 1

    key = jax.random.PRNGKey(0)
    kx, kw_ = jax.random.split(key)
    x = jax.random.normal(kx, (N, Ci, H, W), dtype=jnp.float32)
    # Deterministic stand-in for nn.init.normal_(torch.randn(...)) (std normal).
    weight = jax.random.normal(kw_, (Co, Ci, ksize, ksize), dtype=jnp.float32)

    out = adder2d_forward(x, weight, stride=stride, padding=padding, bias=None)
    out = jax.block_until_ready(out)

    # Pure-JAX reference check of the negative-SAD conv semantics.
    patches_ref, Ho, Wo = _im2col_nchw(x, ksize, ksize, stride, padding)
    ref = -jnp.sum(
        jnp.abs(patches_ref[..., None, :]
                - weight.reshape(Co, -1)[None, None, None, :, :]),
        axis=-1,
    ).transpose(0, 3, 1, 2)
    np.testing.assert_allclose(np.asarray(out), np.asarray(ref), rtol=1e-5, atol=1e-4)

    assert out.shape == (N, Co, H, W), out.shape
    print("KERNEL_OK")
</pallas_src>

<mosaic_0001>
module attributes {stable_mosaic.version = 11 : i64} {
  func.func @adder_sad_kernel(%arg0: i32, %arg1: i32, %arg2: i32, %arg3: memref<256x128xf32, #tpu.memory_space<vmem>>, %arg4: memref<8x128xf32, #tpu.memory_space<vmem>>, %arg5: memref<1x256x8xf32, #tpu.memory_space<vmem>>, %arg6: memref<2048x128xf32, #tpu.memory_space<vmem>>) attributes {dimension_semantics = [#tpu.dimension_semantics<parallel>, #tpu.dimension_semantics<parallel>, #tpu.dimension_semantics<arbitrary>], iteration_bounds = array<i64: 2, 1, 1>, scalar_prefetch = 0 : i64, scratch_operands = 1 : i64, tpu.core_type = #tpu.core_type<tc>, window_params = [{transform_indices = @transform_0, window_bounds = array<i64: 256, 128>}, {transform_indices = @transform_1, window_bounds = array<i64: 8, 128>}, {transform_indices = @transform_2, window_bounds = array<i64: 1, 256, 8>}]} {
    %c0_i32 = arith.constant 0 : i32
    %0 = arith.cmpi eq, %arg2, %c0_i32 : i32
    %1 = arith.extui %0 : i1 to i32
    %c0_i32_0 = arith.constant 0 : i32
    %2 = arith.cmpi ne, %1, %c0_i32_0 : i32
    scf.if %2 {
      %cst = arith.constant 0.000000e+00 : f32
      %7 = vector.broadcast %cst : f32 to vector<2048x128xf32>
      %c0 = arith.constant 0 : index
      %c0_5 = arith.constant 0 : index
      %8 = vector.load %arg6[%c0, %c0_5] : memref<2048x128xf32, #tpu.memory_space<vmem>>, vector<2048x128xf32>
      tpu.vector_store %arg6[%c0, %c0_5], %7 {strides = array<i32>} : memref<2048x128xf32, #tpu.memory_space<vmem>>, vector<2048x128xf32>,
    } else {
    }
    %c0_i32_1 = arith.constant 0 : i32
    %c8_i32 = arith.constant 8 : i32
    %3 = arith.addi %c0_i32_1, %c8_i32 : i32
    %c1_i32 = arith.constant 1 : i32
    scf.for %arg7 = %c0_i32_1 to %3 step %c1_i32  : i32 {
      %7 = arith.index_cast %arg7 : i32 to index
      %c0 = arith.constant 0 : index
      %8 = vector.load %arg4[%7, %c0] : memref<8x128xf32, #tpu.memory_space<vmem>>, vector<1x128xf32>
      %c256_i32 = arith.constant 256 : i32
      %9 = arith.muli %arg7, %c256_i32 : i32
      %c0_i32_5 = arith.constant 0 : i32
      %c128_i32 = arith.constant 128 : i32
      %10 = arith.muli %c0_i32_5, %c128_i32 : i32
      %11 = tpu.assume_multiple %10, 128 : i32
      %12 = arith.index_cast %11 : i32 to index
      %c0_6 = arith.constant 0 : index
      %13 = vector.load %arg3[%12, %c0_6] : memref<256x128xf32, #tpu.memory_space<vmem>>, vector<128x128xf32>
      %14 = vector.broadcast %8 : vector<1x128xf32> to vector<128x128xf32>
      %15 = arith.subf %13, %14 : vector<128x128xf32>
      %16 = math.absf %15 : vector<128x128xf32>
      %17 = arith.addi %9, %11 : i32
      %18 = tpu.assume_multiple %17, 128 : i32
      %19 = arith.index_cast %18 : i32 to index
      %c0_7 = arith.constant 0 : index
      %20 = vector.load %arg6[%19, %c0_7] : memref<2048x128xf32, #tpu.memory_space<vmem>>, vector<128x128xf32>
      %21 = arith.addf %20, %16 : vector<128x128xf32>
      %22 = arith.index_cast %18 : i32 to index
      %c0_8 = arith.constant 0 : index
      %23 = vector.load %arg6[%22, %c0_8] : memref<2048x128xf32, #tpu.memory_space<vmem>>, vector<128x128xf32>
      tpu.vector_store %arg6[%22, %c0_8], %21 {strides = array<i32>} : memref<2048x128xf32, #tpu.memory_space<vmem>>, vector<128x128xf32>,
      %c1_i32_9 = arith.constant 1 : i32
      %c128_i32_10 = arith.constant 128 : i32
      %24 = arith.muli %c1_i32_9, %c128_i32_10 : i32
      %25 = tpu.assume_multiple %24, 128 : i32
      %26 = arith.index_cast %25 : i32 to index
      %c0_11 = arith.constant 0 : index
      %27 = vector.load %arg3[%26, %c0_11] : memref<256x128xf32, #tpu.memory_space<vmem>>, vector<128x128xf32>
      %28 = vector.broadcast %8 : vector<1x128xf32> to vector<128x128xf32>
      %29 = arith.subf %27, %28 : vector<128x128xf32>
      %30 = math.absf %29 : vector<128x128xf32>
      %31 = arith.addi %9, %25 : i32
      %32 = tpu.assume_multiple %31, 128 : i32
      %33 = arith.index_cast %32 : i32 to index
      %c0_12 = arith.constant 0 : index
      %34 = vector.load %arg6[%33, %c0_12] : memref<2048x128xf32, #tpu.memory_space<vmem>>, vector<128x128xf32>
      %35 = arith.addf %34, %30 : vector<128x128xf32>
      %36 = arith.index_cast %32 : i32 to index
      %c0_13 = arith.constant 0 : index
      %37 = vector.load %arg6[%36, %c0_13] : memref<2048x128xf32, #tpu.memory_space<vmem>>, vector<128x128xf32>
      tpu.vector_store %arg6[%36, %c0_13], %35 {strides = array<i32>} : memref<2048x128xf32, #tpu.memory_space<vmem>>, vector<128x128xf32>,
      %c2_i32 = arith.constant 2 : i32
    }
    %c8_i32_2 = arith.constant 8 : i32
    %c0_i32_3 = arith.constant 0 : i32
    %4 = arith.cmpi eq, %arg2, %c0_i32_3 : i32
    %5 = arith.extui %4 : i1 to i32
    %c0_i32_4 = arith.constant 0 : i32
    %6 = arith.cmpi ne, %5, %c0_i32_4 : i32
    scf.if %6 {
      %c0 = arith.constant 0 : index
      %c0_5 = arith.constant 0 : index
      %7 = vector.load %arg6[%c0, %c0_5] : memref<2048x128xf32, #tpu.memory_space<vmem>>, vector<256x128xf32>
      %cst = arith.constant dense<0.000000e+00> : vector<256xf32>
      %8 = vector.multi_reduction <add>, %7, %cst [1] : vector<256x128xf32> to vector<256xf32>
      %9 = vector.shape_cast %8 : vector<256xf32> to vector<256x1xf32>
      %cst_6 = arith.constant 0.000000e+00 : f32
      %10 = vector.broadcast %cst_6 : f32 to vector<256x1xf32>
      %11 = arith.subf %10, %9 : vector<256x1xf32>
      %c0_7 = arith.constant 0 : index
      %c0_8 = arith.constant 0 : index
      %c0_9 = arith.constant 0 : index
      %12 = vector.load %arg5[%c0_7, %c0_8, %c0_9] : memref<1x256x8xf32, #tpu.memory_space<vmem>>, vector<1x256x1xf32>
      %13 = vector.shape_cast %12 : vector<1x256x1xf32> to vector<256x1xf32>
      %14 = vector.shape_cast %11 : vector<256x1xf32> to vector<1x256x1xf32>
      tpu.vector_store %arg5[%c0_7, %c0_8, %c0_9], %14 {strides = array<i32>} : memref<1x256x8xf32, #tpu.memory_space<vmem>>, vector<1x256x1xf32>,
      %c256 = arith.constant 256 : index
      %c0_10 = arith.constant 0 : index
      %15 = vector.load %arg6[%c256, %c0_10] : memref<2048x128xf32, #tpu.memory_space<vmem>>, vector<256x128xf32>
      %cst_11 = arith.constant dense<0.000000e+00> : vector<256xf32>
      %16 = vector.multi_reduction <add>, %15, %cst_11 [1] : vector<256x128xf32> to vector<256xf32>
      %17 = vector.shape_cast %16 : vector<256xf32> to vector<256x1xf32>
      %cst_12 = arith.constant 0.000000e+00 : f32
      %18 = vector.broadcast %cst_12 : f32 to vector<256x1xf32>
      %19 = arith.subf %18, %17 : vector<256x1xf32>
      %c0_13 = arith.constant 0 : index
      %c0_14 = arith.constant 0 : index
      %c1 = arith.constant 1 : index
      %20 = vector.load %arg5[%c0_13, %c0_14, %c1] : memref<1x256x8xf32, #tpu.memory_space<vmem>>, vector<1x256x1xf32>
      %21 = vector.shape_cast %20 : vector<1x256x1xf32> to vector<256x1xf32>
      %22 = vector.shape_cast %19 : vector<256x1xf32> to vector<1x256x1xf32>
      tpu.vector_store %arg5[%c0_13, %c0_14, %c1], %22 {strides = array<i32>} : memref<1x256x8xf32, #tpu.memory_space<vmem>>, vector<1x256x1xf32>,
      %c512 = arith.constant 512 : index
      %c0_15 = arith.constant 0 : index
      %23 = vector.load %arg6[%c512, %c0_15] : memref<2048x128xf32, #tpu.memory_space<vmem>>, vector<256x128xf32>
      %cst_16 = arith.constant dense<0.000000e+00> : vector<256xf32>
      %24 = vector.multi_reduction <add>, %23, %cst_16 [1] : vector<256x128xf32> to vector<256xf32>
      %25 = vector.shape_cast %24 : vector<256xf32> to vector<256x1xf32>
      %cst_17 = arith.constant 0.000000e+00 : f32
      %26 = vector.broadcast %cst_17 : f32 to vector<256x1xf32>
      %27 = arith.subf %26, %25 : vector<256x1xf32>
      %c0_18 = arith.constant 0 : index
      %c0_19 = arith.constant 0 : index
      %c2 = arith.constant 2 : index
      %28 = vector.load %arg5[%c0_18, %c0_19, %c2] : memref<1x256x8xf32, #tpu.memory_space<vmem>>, vector<1x256x1xf32>
      %29 = vector.shape_cast %28 : vector<1x256x1xf32> to vector<256x1xf32>
      %30 = vector.shape_cast %27 : vector<256x1xf32> to vector<1x256x1xf32>
      tpu.vector_store %arg5[%c0_18, %c0_19, %c2], %30 {strides = array<i32>} : memref<1x256x8xf32, #tpu.memory_space<vmem>>, vector<1x256x1xf32>,
      %c768 = arith.constant 768 : index
      %c0_20 = arith.constant 0 : index
      %31 = vector.load %arg6[%c768, %c0_20] : memref<2048x128xf32, #tpu.memory_space<vmem>>, vector<256x128xf32>
      %cst_21 = arith.constant dense<0.000000e+00> : vector<256xf32>
      %32 = vector.multi_reduction <add>, %31, %cst_21 [1] : vector<256x128xf32> to vector<256xf32>
      %33 = vector.shape_cast %32 : vector<256xf32> to vector<256x1xf32>
      %cst_22 = arith.constant 0.000000e+00 : f32
      %34 = vector.broadcast %cst_22 : f32 to vector<256x1xf32>
      %35 = arith.subf %34, %33 : vector<256x1xf32>
      %c0_23 = arith.constant 0 : index
      %c0_24 = arith.constant 0 : index
      %c3 = arith.constant 3 : index
      %36 = vector.load %arg5[%c0_23, %c0_24, %c3] : memref<1x256x8xf32, #tpu.memory_space<vmem>>, vector<1x256x1xf32>
      %37 = vector.shape_cast %36 : vector<1x256x1xf32> to vector<256x1xf32>
      %38 = vector.shape_cast %35 : vector<256x1xf32> to vector<1x256x1xf32>
      tpu.vector_store %arg5[%c0_23, %c0_24, %c3], %38 {strides = array<i32>} : memref<1x256x8xf32, #tpu.memory_space<vmem>>, vector<1x256x1xf32>,
      %c1024 = arith.constant 1024 : index
      %c0_25 = arith.constant 0 : index
      %39 = vector.load %arg6[%c1024, %c0_25] : memref<2048x128xf32, #tpu.memory_space<vmem>>, vector<256x128xf32>
      %cst_26 = arith.constant dense<0.000000e+00> : vector<256xf32>
      %40 = vector.multi_reduction <add>, %39, %cst_26 [1] : vector<256x128xf32> to vector<256xf32>
      %41 = vector.shape_cast %40 : vector<256xf32> to vector<256x1xf32>
      %cst_27 = arith.constant 0.000000e+00 : f32
      %42 = vector.broadcast %cst_27 : f32 to vector<256x1xf32>
      %43 = arith.subf %42, %41 : vector<256x1xf32>
      %c0_28 = arith.constant 0 : index
      %c0_29 = arith.constant 0 : index
      %c4 = arith.constant 4 : index
      %44 = vector.load %arg5[%c0_28, %c0_29, %c4] : memref<1x256x8xf32, #tpu.memory_space<vmem>>, vector<1x256x1xf32>
      %45 = vector.shape_cast %44 : vector<1x256x1xf32> to vector<256x1xf32>
      %46 = vector.shape_cast %43 : vector<256x1xf32> to vector<1x256x1xf32>
      tpu.vector_store %arg5[%c0_28, %c0_29, %c4], %46 {strides = array<i32>} : memref<1x256x8xf32, #tpu.memory_space<vmem>>, vector<1x256x1xf32>,
      %c1280 = arith.constant 1280 : index
      %c0_30 = arith.constant 0 : index
      %47 = vector.load %arg6[%c1280, %c0_30] : memref<2048x128xf32, #tpu.memory_space<vmem>>, vector<256x128xf32>
      %cst_31 = arith.constant dense<0.000000e+00> : vector<256xf32>
      %48 = vector.multi_reduction <add>, %47, %cst_31 [1] : vector<256x128xf32> to vector<256xf32>
      %49 = vector.shape_cast %48 : vector<256xf32> to vector<256x1xf32>
      %cst_32 = arith.constant 0.000000e+00 : f32
      %50 = vector.broadcast %cst_32 : f32 to vector<256x1xf32>
      %51 = arith.subf %50, %49 : vector<256x1xf32>
      %c0_33 = arith.constant 0 : index
      %c0_34 = arith.constant 0 : index
      %c5 = arith.constant 5 : index
      %52 = vector.load %arg5[%c0_33, %c0_34, %c5] : memref<1x256x8xf32, #tpu.memory_space<vmem>>, vector<1x256x1xf32>
      %53 = vector.shape_cast %52 : vector<1x256x1xf32> to vector<256x1xf32>
      %54 = vector.shape_cast %51 : vector<256x1xf32> to vector<1x256x1xf32>
      tpu.vector_store %arg5[%c0_33, %c0_34, %c5], %54 {strides = array<i32>} : memref<1x256x8xf32, #tpu.memory_space<vmem>>, vector<1x256x1xf32>,
      %c1536 = arith.constant 1536 : index
      %c0_35 = arith.constant 0 : index
      %55 = vector.load %arg6[%c1536, %c0_35] : memref<2048x128xf32, #tpu.memory_space<vmem>>, vector<256x128xf32>
      %cst_36 = arith.constant dense<0.000000e+00> : vector<256xf32>
      %56 = vector.multi_reduction <add>, %55, %cst_36 [1] : vector<256x128xf32> to vector<256xf32>
      %57 = vector.shape_cast %56 : vector<256xf32> to vector<256x1xf32>
      %cst_37 = arith.constant 0.000000e+00 : f32
      %58 = vector.broadcast %cst_37 : f32 to vector<256x1xf32>
      %59 = arith.subf %58, %57 : vector<256x1xf32>
      %c0_38 = arith.constant 0 : index
      %c0_39 = arith.constant 0 : index
      %c6 = arith.constant 6 : index
      %60 = vector.load %arg5[%c0_38, %c0_39, %c6] : memref<1x256x8xf32, #tpu.memory_space<vmem>>, vector<1x256x1xf32>
      %61 = vector.shape_cast %60 : vector<1x256x1xf32> to vector<256x1xf32>
      %62 = vector.shape_cast %59 : vector<256x1xf32> to vector<1x256x1xf32>
      tpu.vector_store %arg5[%c0_38, %c0_39, %c6], %62 {strides = array<i32>} : memref<1x256x8xf32, #tpu.memory_space<vmem>>, vector<1x256x1xf32>,
      %c1792 = arith.constant 1792 : index
      %c0_40 = arith.constant 0 : index
      %63 = vector.load %arg6[%c1792, %c0_40] : memref<2048x128xf32, #tpu.memory_space<vmem>>, vector<256x128xf32>
      %cst_41 = arith.constant dense<0.000000e+00> : vector<256xf32>
      %64 = vector.multi_reduction <add>, %63, %cst_41 [1] : vector<256x128xf32> to vector<256xf32>
      %65 = vector.shape_cast %64 : vector<256xf32> to vector<256x1xf32>
      %cst_42 = arith.constant 0.000000e+00 : f32
      %66 = vector.broadcast %cst_42 : f32 to vector<256x1xf32>
      %67 = arith.subf %66, %65 : vector<256x1xf32>
      %c0_43 = arith.constant 0 : index
      %c0_44 = arith.constant 0 : index
      %c7 = arith.constant 7 : index
      %68 = vector.load %arg5[%c0_43, %c0_44, %c7] : memref<1x256x8xf32, #tpu.memory_space<vmem>>, vector<1x256x1xf32>
      %69 = vector.shape_cast %68 : vector<1x256x1xf32> to vector<256x1xf32>
      %70 = vector.shape_cast %67 : vector<256x1xf32> to vector<1x256x1xf32>
      tpu.vector_store %arg5[%c0_43, %c0_44, %c7], %70 {strides = array<i32>} : memref<1x256x8xf32, #tpu.memory_space<vmem>>, vector<1x256x1xf32>,
    } else {
    }
    return
  }
  func.func @transform_0(%arg0: i32, %arg1: i32, %arg2: i32) -> (i32, i32) {
    %c0_i32 = arith.constant 0 : i32
    return %arg0, %arg2 : i32, i32
  }
  func.func @transform_1(%arg0: i32, %arg1: i32, %arg2: i32) -> (i32, i32) {
    %c0_i32 = arith.constant 0 : i32
    return %arg1, %arg2 : i32, i32
  }
  func.func @transform_2(%arg0: i32, %arg1: i32, %arg2: i32) -> (i32, i32, i32) {
    %c0_i32 = arith.constant 0 : i32
    %c0_i32_0 = arith.constant 0 : i32
    return %arg1, %arg0, %c0_i32 : i32, i32, i32
  }
}

</mosaic_0001>

<llo_original>
// kernel: adder2d_forward.1
$region0: #{adder2d_forward.1}
  #allocation0 [shape = 'u32[]', space=smem, size = 0x4, offset = 0x4, fixed_abs, tag = 'smem constant byte address 0x4 - core index']
  #allocation1 [shape = 'u32[72,128]{1,0:T(1,128)}', space=vmem, size = 0x9000, scoped, tag = 'internal scratch']
  #allocation2 [shape = 'f32[2048,128]{1,0:T(8,128)}', space=vmem, size = 0x100000, scoped, tag = 'scratch operand']
  %s0 = inlined_call_operand.vmem [shape: f32[512,128], index: 0, kind: input, shape index: {}]
  %s1 = inlined_call_operand.vmem [shape: f32[8,128], index: 1, kind: input, shape index: {}]
  %s2 = inlined_call_operand.vmem [shape: f32[1,512,8], index: 2, kind: output, shape index: {}]
  %s3 = sld [smem:[#allocation0]]
  $region56: #{adder2d_forward.1} parent=0
    _
  %s5 = ssub.s32 1, %s3
  %s6 = scalar_select 0, %s5, %s3
  loop: start=0, step=1, limit=4
  $region2: #{adder2d_forward.1} parent=0 // loop_pre_header
    _
  $region3: #{adder2d_forward.1} parent=0 // loop_header
    %s8 = sphi 0, %s12
    %p9 = scmp.ge.s32.totalorder %s8, 4
    %s15 = sphi 0, %s34
    %s16 = sphi 0, %s30
    %s17 = sphi 0, %s26
    %s18 = sphi 0, %s15
    %s19 = sphi 0, %s16
    %s20 = sphi 0, %s17
    %s21 = sphi 0, %s18
    %s22 = sphi 0, %s19
    %s23 = sphi 0, %s20
    %s39 = sphi 0, %s41
    %s42 = sphi 0, %s39
    %s43 = sphi 0, %s42
    %s59 = sphi 0, %s43
    %s67 = sphi 0, %s69
    %s70 = sphi 0, %s67
    %s71 = sphi 0, %s70
    %s87 = sphi 0, %s71
    %s95 = sphi 0, %s97
    %s98 = sphi 0, %s95
    %s99 = sphi 0, %s98
    %s115 = sphi 0, %s99
  $region4: #{adder2d_forward.1} parent=0 // loop_header_branch
    %11 = sbr.rel (%p9) target = $region8
  $region5: #{adder2d_forward.1} parent=0 // loop_body
    %s13 = ssub.s32 %s8, 1
    %s14 = ssub.s32 %s8, 2
    %s24 = sadd.s32 1, %s17
    %p25 = scmp.ge.s32.totalorder %s24, 1
    %s26 = scalar_select %p25, 0, %s24
    %s27 = sadd.s32 1, %s16
    %s28 = scalar_select %p25, %s27, %s16
    %p29 = scmp.ge.s32.totalorder %s28, 1
    %s30 = scalar_select %p29, 0, %s28
    %s31 = sadd.s32 1, %s15
    %s32 = scalar_select %p29, %s31, %s15
    %p33 = scmp.ge.s32.totalorder %s32, 2
    %s34 = scalar_select %p33, 0, %s32
    %s35 = ssub.s32 %s15, %s34
    %s36 = ssub.s32 %s17, %s26
    %s37 = sor.u32 %s35, %s36
    %p38 = scmp.eq.s32.totalorder %s37, 0
    %s40 = sadd.s32 %s39, 1
    %s41 = scalar_select %p38, %s39, %s40
    %p44 = pneg %p38
    %p45 = scmp.eq.s32.totalorder %s8, 1
    %p46 = por %p44, %p45
    %p47 = scmp.ne.s32.totalorder %s39, %s42
    %p48 = scmp.eq.s32.totalorder %s8, 0
    %p49 = por %p47, %p48
    %p50 = scmp.ne.s32.totalorder %s39, %s42
    %p51 = scmp.eq.s32.totalorder %s13, 1
    %p52 = por %p50, %p51
    %p53 = scmp.ne.s32.totalorder %s42, %s43
    %p54 = scmp.eq.s32.totalorder %s13, 0
    %p55 = por %p53, %p54
    %p56 = scmp.ne.s32.totalorder %s42, %s43
    %p57 = scmp.eq.s32.totalorder %s14, 1
    %p58 = por %p56, %p57
    %p60 = scmp.ne.s32.totalorder %s43, %s59
    %p61 = scmp.eq.s32.totalorder %s14, 0
    %p62 = por %p60, %p61
    %s63 = ssub.s32 %s16, %s30
    %s64 = ssub.s32 %s17, %s26
    %s65 = sor.u32 %s63, %s64
    %p66 = scmp.eq.s32.totalorder %s65, 0
    %s68 = sadd.s32 %s67, 1
    %s69 = scalar_select %p66, %s67, %s68
    %p72 = pneg %p66
    %p73 = scmp.eq.s32.totalorder %s8, 1
    %p74 = por %p72, %p73
    %p75 = scmp.ne.s32.totalorder %s67, %s70
    %p76 = scmp.eq.s32.totalorder %s8, 0
    %p77 = por %p75, %p76
    %p78 = scmp.ne.s32.totalorder %s67, %s70
    %p79 = scmp.eq.s32.totalorder %s13, 1
    %p80 = por %p78, %p79
    %p81 = scmp.ne.s32.totalorder %s70, %s71
    %p82 = scmp.eq.s32.totalorder %s13, 0
    %p83 = por %p81, %p82
    %p84 = scmp.ne.s32.totalorder %s70, %s71
    %p85 = scmp.eq.s32.totalorder %s14, 1
    %p86 = por %p84, %p85
    %p88 = scmp.ne.s32.totalorder %s71, %s87
    %p89 = scmp.eq.s32.totalorder %s14, 0
    %p90 = por %p88, %p89
    %s91 = ssub.s32 %s16, %s30
    %s92 = ssub.s32 %s15, %s34
    %s93 = sor.u32 %s91, %s92
    %p94 = scmp.eq.s32.totalorder %s93, 0
    %s96 = sadd.s32 %s95, 1
    %s97 = scalar_select %p94, %s95, %s96
    %p100 = pneg %p94
    %p101 = scmp.eq.s32.totalorder %s8, 1
    %p102 = por %p100, %p101
    %p103 = scmp.ne.s32.totalorder %s95, %s98
    %p104 = scmp.eq.s32.totalorder %s8, 0
    %p105 = por %p103, %p104
    %p106 = scmp.ne.s32.totalorder %s95, %s98
    %p107 = scmp.eq.s32.totalorder %s13, 1
    %p108 = por %p106, %p107
    %p109 = scmp.ne.s32.totalorder %s98, %s99
    %p110 = scmp.eq.s32.totalorder %s13, 0
    %p111 = por %p109, %p110
    %p112 = scmp.ne.s32.totalorder %s98, %s99
    %p113 = scmp.eq.s32.totalorder %s14, 1
    %p114 = por %p112, %p113
    %p116 = scmp.ne.s32.totalorder %s99, %s115
    %p117 = scmp.eq.s32.totalorder %s14, 0
    %p118 = por %p116, %p117
    %p119 = scmp.le.s32.totalorder 1, %s8
    %p120 = scmp.lt.s32.totalorder %s8, 3
    %p121 = pnand %p119, %p120
    %p122 = pneg %p121
    // Predicated region
    $region9: #{adder2d_forward.1} parent=5 // pred_check
      _
    $region10: #{adder2d_forward.1} parent=5 // pred_check_branch
      %124 = sbr.rel (%p121) target = $region12
    $region11: #{adder2d_forward.1} parent=5 // pred_region
      %s125 = ssub.s32 %s8, 1
      // Predicated region
      $region13: #{adder2d_forward.1} parent=11 // pred_check
        %p126 = pneg %p83
      $region14: #{adder2d_forward.1} parent=11 // pred_check_branch
        %128 = sbr.rel (%p126) target = $region16
      $region15: #{adder2d_forward.1} parent=11 // pred_region
        %p129 = scmp.lt.s32.totalorder %s19, 0
        %s130 = scalar_select %p129, %s19, 0
        %p131 = scmp.lt.s32.totalorder %s20, 0
        %s132 = scalar_select %p131, %s20, 0
        %s133 = sadd.s32 %s132, %s130
        %s134 = smul.addr %s133, 8
        %s135 = scalar_lea.vmem %s1, %s134
      $region16: #{adder2d_forward.1} parent=11 // pred_fallthru
        _
    $region12: #{adder2d_forward.1} parent=5 // pred_fallthru
      _
    %p136 = scmp.lt.s32.totalorder %s8, 2
    // Predicated region
    $region17: #{adder2d_forward.1} parent=5 // pred_check
      %p137 = pneg %p136
    $region18: #{adder2d_forward.1} parent=5 // pred_check_branch
      %139 = sbr.rel (%p137) target = $region20
    $region19: #{adder2d_forward.1} parent=5 // pred_region
      // Predicated region
      $region21: #{adder2d_forward.1} parent=19 // pred_check
        %p140 = pneg %p49
      $region22: #{adder2d_forward.1} parent=19 // pred_check_branch
        %142 = sbr.rel (%p140) target = $region24
      $region23: #{adder2d_forward.1} parent=19 // pred_region
        %s143 = smul.u32 32, %s15
        %p144 = scmp.lt.s32.totalorder %s143, 63
        %s145 = scalar_select %p144, %s143, 63
        %p146 = scmp.lt.s32.totalorder %s17, 0
        %s147 = scalar_select %p146, %s17, 0
        %s148 = sadd.s32 %s147, %s145
        %s149 = smul.addr %s148, 8
        %s150 = scalar_lea.vmem %s0, %s149
        %s151 = smul.u32 32, %s15
      $region24: #{adder2d_forward.1} parent=19 // pred_fallthru
        _
    $region20: #{adder2d_forward.1} parent=5 // pred_fallthru
      _
    %p152 = scmp.le.s32.totalorder 1, %s8
    %p153 = scmp.lt.s32.totalorder %s8, 3
    %p154 = pnand %p152, %p153
    %p155 = pneg %p154
    // Predicated region
    $region25: #{adder2d_forward.1} parent=5 // pred_check
      _
    $region26: #{adder2d_forward.1} parent=5 // pred_check_branch
      %157 = sbr.rel (%p154) target = $region28
    $region27: #{adder2d_forward.1} parent=5 // pred_region
      %s158 = ssub.s32 %s8, 1
      %s159 = smul.u32 32, %s18
      %p160 = scmp.lt.s32.totalorder %s159, 63
      %s161 = scalar_select %p160, %s159, 63
      %p162 = scmp.lt.s32.totalorder %s20, 0
      %s163 = scalar_select %p162, %s20, 0
      %s164 = sadd.s32 %s163, %s161
      %s165 = smul.addr %s164, 8
      %s166 = scalar_lea.vmem %s0, %s165
      %p167 = pneg %p55
      %p168 = pneg %p52
      %p169 = scmp.lt.s32.totalorder %s19, 0
      %s170 = scalar_select %p169, %s19, 0
      %p171 = scmp.lt.s32.totalorder %s20, 0
      %s172 = scalar_select %p171, %s20, 0
      %s173 = sadd.s32 %s172, %s170
      %s174 = smul.addr %s173, 8
      %s175 = scalar_lea.vmem %s1, %s174
      %p176 = pneg %p83
      %p177 = pneg %p80
      %p178 = pneg %p111
      %p179 = pneg %p108
      %s180 = smul.u32 32, %s18
      %p181 = scmp.lt.s32.totalorder %s19, 0
      %s182 = scalar_select %p181, %s19, 0
      %p183 = scmp.lt.s32.totalorder %s180, 63
      %s184 = scalar_select %p183, %s180, 63
      %s185 = smul.addr %s182, 64
      %s186 = sadd.s32 %s184, %s185
      %s187 = smul.addr %s186, 8
      %s188 = scalar_lea.vmem %s2, %s187
      %s189 = smul.u32 32, %s18
      %p190 = scmp.lt.s32.totalorder %s189, 63
      %s191 = scalar_select %p190, %s189, 63
      %p192 = scmp.lt.s32.totalorder %s20, 0
      %s193 = scalar_select %p192, %s20, 0
      %s194 = sadd.s32 %s193, %s191
      %s195 = smul.addr %s194, 8
      %s196 = scalar_lea.vmem %s0, %s195
      %s197 = smul.u32 32, %s18
      %p198 = scmp.lt.s32.totalorder %s19, 0
      %s199 = scalar_select %p198, %s19, 0
      %p200 = scmp.lt.s32.totalorder %s20, 0
      %s201 = scalar_select %p200, %s20, 0
      %s202 = sadd.s32 %s201, %s199
      %s203 = smul.addr %s202, 8
      %s204 = scalar_lea.vmem %s1, %s203
      %s205 = smul.u32 32, %s18
      %p206 = scmp.lt.s32.totalorder %s19, 0
      %s207 = scalar_select %p206, %s19, 0
      %p208 = scmp.lt.s32.totalorder %s205, 63
      %s209 = scalar_select %p208, %s205, 63
      %s210 = smul.addr %s207, 64
      %s211 = sadd.s32 %s209, %s210
      %s212 = smul.addr %s211, 8
      %s213 = scalar_lea.vmem %s2, %s212
      %s214 = smul.u32 32, %s18
      %p215 = scmp.eq.s32.totalorder %s20, 0
      // Predicated region
      $region29: #{adder2d_forward.1} parent=27 // pred_check
        %p216 = pneg %p215
      $region30: #{adder2d_forward.1} parent=27 // pred_check_branch
        %218 = sbr.rel (%p216) target = $region32
      $region31: #{adder2d_forward.1} parent=27 // pred_region
        %219 = vst [vmem:[#allocation2] sm:$0xff] 0.0
        %220 = vst [vmem:[#allocation2 + $0x8] sm:$0xff] 0.0
        %221 = vst [vmem:[#allocation2 + $0x10] sm:$0xff] 0.0
        %222 = vst [vmem:[#allocation2 + $0x18] sm:$0xff] 0.0
        %223 = vst [vmem:[#allocation2 + $0x20] sm:$0xff] 0.0
        %224 = vst [vmem:[#allocation2 + $0x28] sm:$0xff] 0.0
        %225 = vst [vmem:[#allocation2 + $0x30] sm:$0xff] 0.0
        %226 = vst [vmem:[#allocation2 + $0x38] sm:$0xff] 0.0
        %227 = vst [vmem:[#allocation2 + $0x40] sm:$0xff] 0.0
        %228 = vst [vmem:[#allocation2 + $0x48] sm:$0xff] 0.0
        %229 = vst [vmem:[#allocation2 + $0x50] sm:$0xff] 0.0
        %230 = vst [vmem:[#allocation2 + $0x58] sm:$0xff] 0.0
        %231 = vst [vmem:[#allocation2 + $0x60] sm:$0xff] 0.0
        %232 = vst [vmem:[#allocation2 + $0x68] sm:$0xff] 0.0
        %233 = vst [vmem:[#allocation2 + $0x70] sm:$0xff] 0.0
        %234 = vst [vmem:[#allocation2 + $0x78] sm:$0xff] 0.0
        %235 = vst [vmem:[#allocation2 + $0x80] sm:$0xff] 0.0
        %236 = vst [vmem:[#allocation2 + $0x88] sm:$0xff] 0.0
        %237 = vst [vmem:[#allocation2 + $0x90] sm:$0xff] 0.0
        %238 = vst [vmem:[#allocation2 + $0x98] sm:$0xff] 0.0
        %239 = vst [vmem:[#allocation2 + $0xa0] sm:$0xff] 0.0
        %240 = vst [vmem:[#allocation2 + $0xa8] sm:$0xff] 0.0
        %241 = vst [vmem:[#allocation2 + $0xb0] sm:$0xff] 0.0
        %242 = vst [vmem:[#allocation2 + $0xb8] sm:$0xff] 0.0
        %243 = vst [vmem:[#allocation2 + $0xc0] sm:$0xff] 0.0
        %244 = vst [vmem:[#allocation2 + $0xc8] sm:$0xff] 0.0
        %245 = vst [vmem:[#allocation2 + $0xd0] sm:$0xff] 0.0
        %246 = vst [vmem:[#allocation2 + $0xd8] sm:$0xff] 0.0
        %247 = vst [vmem:[#allocation2 + $0xe0] sm:$0xff] 0.0
        %248 = vst [vmem:[#allocation2 + $0xe8] sm:$0xff] 0.0
        %249 = vst [vmem:[#allocation2 + $0xf0] sm:$0xff] 0.0
        %250 = vst [vmem:[#allocation2 + $0xf8] sm:$0xff] 0.0
        %251 = vst [vmem:[#allocation2 + $0x100] sm:$0xff] 0.0
        %252 = vst [vmem:[#allocation2 + $0x108] sm:$0xff] 0.0
        %253 = vst [vmem:[#allocation2 + $0x110] sm:$0xff] 0.0
        %254 = vst [vmem:[#allocation2 + $0x118] sm:$0xff] 0.0
        %255 = vst [vmem:[#allocation2 + $0x120] sm:$0xff] 0.0
        %256 = vst [vmem:[#allocation2 + $0x128] sm:$0xff] 0.0
        %257 = vst [vmem:[#allocation2 + $0x130] sm:$0xff] 0.0
        %258 = vst [vmem:[#allocation2 + $0x138] sm:$0xff] 0.0
        %259 = vst [vmem:[#allocation2 + $0x140] sm:$0xff] 0.0
        %260 = vst [vmem:[#allocation2 + $0x148] sm:$0xff] 0.0
        %261 = vst [vmem:[#allocation2 + $0x150] sm:$0xff] 0.0
        %262 = vst [vmem:[#allocation2 + $0x158] sm:$0xff] 0.0
        %263 = vst [vmem:[#allocation2 + $0x160] sm:$0xff] 0.0
        %264 = vst [vmem:[#allocation2 + $0x168] sm:$0xff] 0.0
        %265 = vst [vmem:[#allocation2 + $0x170] sm:$0xff] 0.0
        %266 = vst [vmem:[#allocation2 + $0x178] sm:$0xff] 0.0
        %267 = vst [vmem:[#allocation2 + $0x180] sm:$0xff] 0.0
        %268 = vst [vmem:[#allocation2 + $0x188] sm:$0xff] 0.0
        %269 = vst [vmem:[#allocation2 + $0x190] sm:$0xff] 0.0
        %270 = vst [vmem:[#allocation2 + $0x198] sm:$0xff] 0.0
        %271 = vst [vmem:[#allocation2 + $0x1a0] sm:$0xff] 0.0
        %272 = vst [vmem:[#allocation2 + $0x1a8] sm:$0xff] 0.0
        %273 = vst [vmem:[#allocation2 + $0x1b0] sm:$0xff] 0.0
        %274 = vst [vmem:[#allocation2 + $0x1b8] sm:$0xff] 0.0
        %275 = vst [vmem:[#allocation2 + $0x1c0] sm:$0xff] 0.0
        %276 = vst [vmem:[#allocation2 + $0x1c8] sm:$0xff] 0.0
        %277 = vst [vmem:[#allocation2 + $0x1d0] sm:$0xff] 0.0
        %278 = vst [vmem:[#allocation2 + $0x1d8] sm:$0xff] 0.0
        %279 = vst [vmem:[#allocation2 + $0x1e0] sm:$0xff] 0.0
        %280 = vst [vmem:[#allocation2 + $0x1e8] sm:$0xff] 0.0
        %281 = vst [vmem:[#allocation2 + $0x1f0] sm:$0xff] 0.0
        %282 = vst [vmem:[#allocation2 + $0x1f8] sm:$0xff] 0.0
        %283 = vst [vmem:[#allocation2 + $0x200] sm:$0xff] 0.0
        %284 = vst [vmem:[#allocation2 + $0x208] sm:$0xff] 0.0
        %285 = vst [vmem:[#allocation2 + $0x210] sm:$0xff] 0.0
        %286 = vst [vmem:[#allocation2 + $0x218] sm:$0xff] 0.0
        %287 = vst [vmem:[#allocation2 + $0x220] sm:$0xff] 0.0
        %288 = vst [vmem:[#allocation2 + $0x228] sm:$0xff] 0.0
        %289 = vst [vmem:[#allocation2 + $0x230] sm:$0xff] 0.0
        %290 = vst [vmem:[#allocation2 + $0x238] sm:$0xff] 0.0
        %291 = vst [vmem:[#allocation2 + $0x240] sm:$0xff] 0.0
        %292 = vst [vmem:[#allocation2 + $0x248] sm:$0xff] 0.0
        %293 = vst [vmem:[#allocation2 + $0x250] sm:$0xff] 0.0
        %294 = vst [vmem:[#allocation2 + $0x258] sm:$0xff] 0.0
        %295 = vst [vmem:[#allocation2 + $0x260] sm:$0xff] 0.0
        %296 = vst [vmem:[#allocation2 + $0x268] sm:$0xff] 0.0
        %297 = vst [vmem:[#allocation2 + $0x270] sm:$0xff] 0.0
        %298 = vst [vmem:[#allocation2 + $0x278] sm:$0xff] 0.0
        %299 = vst [vmem:[#allocation2 + $0x280] sm:$0xff] 0.0
        %300 = vst [vmem:[#allocation2 + $0x288] sm:$0xff] 0.0
        %301 = vst [vmem:[#allocation2 + $0x290] sm:$0xff] 0.0
        %302 = vst [vmem:[#allocation2 + $0x298] sm:$0xff] 0.0
        %303 = vst [vmem:[#allocation2 + $0x2a0] sm:$0xff] 0.0
        %304 = vst [vmem:[#allocation2 + $0x2a8] sm:$0xff] 0.0
        %305 = vst [vmem:[#allocation2 + $0x2b0] sm:$0xff] 0.0
        %306 = vst [vmem:[#allocation2 + $0x2b8] sm:$0xff] 0.0
        %307 = vst [vmem:[#allocation2 + $0x2c0] sm:$0xff] 0.0
        %308 = vst [vmem:[#allocation2 + $0x2c8] sm:$0xff] 0.0
        %309 = vst [vmem:[#allocation2 + $0x2d0] sm:$0xff] 0.0
        %310 = vst [vmem:[#allocation2 + $0x2d8] sm:$0xff] 0.0
        %311 = vst [vmem:[#allocation2 + $0x2e0] sm:$0xff] 0.0
        %312 = vst [vmem:[#allocation2 + $0x2e8] sm:$0xff] 0.0
        %313 = vst [vmem:[#allocation2 + $0x2f0] sm:$0xff] 0.0
        %314 = vst [vmem:[#allocation2 + $0x2f8] sm:$0xff] 0.0
        %315 = vst [vmem:[#allocation2 + $0x300] sm:$0xff] 0.0
        %316 = vst [vmem:[#allocation2 + $0x308] sm:$0xff] 0.0
        %317 = vst [vmem:[#allocation2 + $0x310] sm:$0xff] 0.0
        %318 = vst [vmem:[#allocation2 + $0x318] sm:$0xff] 0.0
        %319 = vst [vmem:[#allocation2 + $0x320] sm:$0xff] 0.0
        %320 = vst [vmem:[#allocation2 + $0x328] sm:$0xff] 0.0
        %321 = vst [vmem:[#allocation2 + $0x330] sm:$0xff] 0.0
        %322 = vst [vmem:[#allocation2 + $0x338] sm:$0xff] 0.0
        %323 = vst [vmem:[#allocation2 + $0x340] sm:$0xff] 0.0
        %324 = vst [vmem:[#allocation2 + $0x348] sm:$0xff] 0.0
        %325 = vst [vmem:[#allocation2 + $0x350] sm:$0xff] 0.0
        %326 = vst [vmem:[#allocation2 + $0x358] sm:$0xff] 0.0
        %327 = vst [vmem:[#allocation2 + $0x360] sm:$0xff] 0.0
        %328 = vst [vmem:[#allocation2 + $0x368] sm:$0xff] 0.0
        %329 = vst [vmem:[#allocation2 + $0x370] sm:$0xff] 0.0
        %330 = vst [vmem:[#allocation2 + $0x378] sm:$0xff] 0.0
        %331 = vst [vmem:[#allocation2 + $0x380] sm:$0xff] 0.0
        %332 = vst [vmem:[#allocation2 + $0x388] sm:$0xff] 0.0
        %333 = vst [vmem:[#allocation2 + $0x390] sm:$0xff] 0.0
        %334 = vst [vmem:[#allocation2 + $0x398] sm:$0xff] 0.0
        %335 = vst [vmem:[#allocation2 + $0x3a0] sm:$0xff] 0.0
        %336 = vst [vmem:[#allocation2 + $0x3a8] sm:$0xff] 0.0
        %337 = vst [vmem:[#allocation2 + $0x3b0] sm:$0xff] 0.0
        %338 = vst [vmem:[#allocation2 + $0x3b8] sm:$0xff] 0.0
        %339 = vst [vmem:[#allocation2 + $0x3c0] sm:$0xff] 0.0
        %340 = vst [vmem:[#allocation2 + $0x3c8] sm:$0xff] 0.0
        %341 = vst [vmem:[#allocation2 + $0x3d0] sm:$0xff] 0.0
        %342 = vst [vmem:[#allocation2 + $0x3d8] sm:$0xff] 0.0
        %343 = vst [vmem:[#allocation2 + $0x3e0] sm:$0xff] 0.0
        %344 = vst [vmem:[#allocation2 + $0x3e8] sm:$0xff] 0.0
        %345 = vst [vmem:[#allocation2 + $0x3f0] sm:$0xff] 0.0
        %346 = vst [vmem:[#allocation2 + $0x3f8] sm:$0xff] 0.0
        %347 = vst [vmem:[#allocation2 + $0x400] sm:$0xff] 0.0
        %348 = vst [vmem:[#allocation2 + $0x408] sm:$0xff] 0.0
        %349 = vst [vmem:[#allocation2 + $0x410] sm:$0xff] 0.0
        %350 = vst [vmem:[#allocation2 + $0x418] sm:$0xff] 0.0
        %351 = vst [vmem:[#allocation2 + $0x420] sm:$0xff] 0.0
        %352 = vst [vmem:[#allocation2 + $0x428] sm:$0xff] 0.0
        %353 = vst [vmem:[#allocation2 + $0x430] sm:$0xff] 0.0
        %354 = vst [vmem:[#allocation2 + $0x438] sm:$0xff] 0.0
        %355 = vst [vmem:[#allocation2 + $0x440] sm:$0xff] 0.0
        %356 = vst [vmem:[#allocation2 + $0x448] sm:$0xff] 0.0
        %357 = vst [vmem:[#allocation2 + $0x450] sm:$0xff] 0.0
        %358 = vst [vmem:[#allocation2 + $0x458] sm:$0xff] 0.0
        %359 = vst [vmem:[#allocation2 + $0x460] sm:$0xff] 0.0
        %360 = vst [vmem:[#allocation2 + $0x468] sm:$0xff] 0.0
        %361 = vst [vmem:[#allocation2 + $0x470] sm:$0xff] 0.0
        %362 = vst [vmem:[#allocation2 + $0x478] sm:$0xff] 0.0
        %363 = vst [vmem:[#allocation2 + $0x480] sm:$0xff] 0.0
        %364 = vst [vmem:[#allocation2 + $0x488] sm:$0xff] 0.0
        %365 = vst [vmem:[#allocation2 + $0x490] sm:$0xff] 0.0
        %366 = vst [vmem:[#allocation2 + $0x498] sm:$0xff] 0.0
        %367 = vst [vmem:[#allocation2 + $0x4a0] sm:$0xff] 0.0
        %368 = vst [vmem:[#allocation2 + $0x4a8] sm:$0xff] 0.0
        %369 = vst [vmem:[#allocation2 + $0x4b0] sm:$0xff] 0.0
        %370 = vst [vmem:[#allocation2 + $0x4b8] sm:$0xff] 0.0
        %371 = vst [vmem:[#allocation2 + $0x4c0] sm:$0xff] 0.0
        %372 = vst [vmem:[#allocation2 + $0x4c8] sm:$0xff] 0.0
        %373 = vst [vmem:[#allocation2 + $0x4d0] sm:$0xff] 0.0
        %374 = vst [vmem:[#allocation2 + $0x4d8] sm:$0xff] 0.0
        %375 = vst [vmem:[#allocation2 + $0x4e0] sm:$0xff] 0.0
        %376 = vst [vmem:[#allocation2 + $0x4e8] sm:$0xff] 0.0
        %377 = vst [vmem:[#allocation2 + $0x4f0] sm:$0xff] 0.0
        %378 = vst [vmem:[#allocation2 + $0x4f8] sm:$0xff] 0.0
        %379 = vst [vmem:[#allocation2 + $0x500] sm:$0xff] 0.0
        %380 = vst [vmem:[#allocation2 + $0x508] sm:$0xff] 0.0
        %381 = vst [vmem:[#allocation2 + $0x510] sm:$0xff] 0.0
        %382 = vst [vmem:[#allocation2 + $0x518] sm:$0xff] 0.0
        %383 = vst [vmem:[#allocation2 + $0x520] sm:$0xff] 0.0
        %384 = vst [vmem:[#allocation2 + $0x528] sm:$0xff] 0.0
        %385 = vst [vmem:[#allocation2 + $0x530] sm:$0xff] 0.0
        %386 = vst [vmem:[#allocation2 + $0x538] sm:$0xff] 0.0
        %387 = vst [vmem:[#allocation2 + $0x540] sm:$0xff] 0.0
        %388 = vst [vmem:[#allocation2 + $0x548] sm:$0xff] 0.0
        %389 = vst [vmem:[#allocation2 + $0x550] sm:$0xff] 0.0
        %390 = vst [vmem:[#allocation2 + $0x558] sm:$0xff] 0.0
        %391 = vst [vmem:[#allocation2 + $0x560] sm:$0xff] 0.0
        %392 = vst [vmem:[#allocation2 + $0x568] sm:$0xff] 0.0
        %393 = vst [vmem:[#allocation2 + $0x570] sm:$0xff] 0.0
        %394 = vst [vmem:[#allocation2 + $0x578] sm:$0xff] 0.0
        %395 = vst [vmem:[#allocation2 + $0x580] sm:$0xff] 0.0
        %396 = vst [vmem:[#allocation2 + $0x588] sm:$0xff] 0.0
        %397 = vst [vmem:[#allocation2 + $0x590] sm:$0xff] 0.0
        %398 = vst [vmem:[#allocation2 + $0x598] sm:$0xff] 0.0
        %399 = vst [vmem:[#allocation2 + $0x5a0] sm:$0xff] 0.0
        %400 = vst [vmem:[#allocation2 + $0x5a8] sm:$0xff] 0.0
        %401 = vst [vmem:[#allocation2 + $0x5b0] sm:$0xff] 0.0
        %402 = vst [vmem:[#allocation2 + $0x5b8] sm:$0xff] 0.0
        %403 = vst [vmem:[#allocation2 + $0x5c0] sm:$0xff] 0.0
        %404 = vst [vmem:[#allocation2 + $0x5c8] sm:$0xff] 0.0
        %405 = vst [vmem:[#allocation2 + $0x5d0] sm:$0xff] 0.0
        %406 = vst [vmem:[#allocation2 + $0x5d8] sm:$0xff] 0.0
        %407 = vst [vmem:[#allocation2 + $0x5e0] sm:$0xff] 0.0
        %408 = vst [vmem:[#allocation2 + $0x5e8] sm:$0xff] 0.0
        %409 = vst [vmem:[#allocation2 + $0x5f0] sm:$0xff] 0.0
        %410 = vst [vmem:[#allocation2 + $0x5f8] sm:$0xff] 0.0
        %411 = vst [vmem:[#allocation2 + $0x600] sm:$0xff] 0.0
        %412 = vst [vmem:[#allocation2 + $0x608] sm:$0xff] 0.0
        %413 = vst [vmem:[#allocation2 + $0x610] sm:$0xff] 0.0
        %414 = vst [vmem:[#allocation2 + $0x618] sm:$0xff] 0.0
        %415 = vst [vmem:[#allocation2 + $0x620] sm:$0xff] 0.0
        %416 = vst [vmem:[#allocation2 + $0x628] sm:$0xff] 0.0
        %417 = vst [vmem:[#allocation2 + $0x630] sm:$0xff] 0.0
        %418 = vst [vmem:[#allocation2 + $0x638] sm:$0xff] 0.0
        %419 = vst [vmem:[#allocation2 + $0x640] sm:$0xff] 0.0
        %420 = vst [vmem:[#allocation2 + $0x648] sm:$0xff] 0.0
        %421 = vst [vmem:[#allocation2 + $0x650] sm:$0xff] 0.0
        %422 = vst [vmem:[#allocation2 + $0x658] sm:$0xff] 0.0
        %423 = vst [vmem:[#allocation2 + $0x660] sm:$0xff] 0.0
        %424 = vst [vmem:[#allocation2 + $0x668] sm:$0xff] 0.0
        %425 = vst [vmem:[#allocation2 + $0x670] sm:$0xff] 0.0
        %426 = vst [vmem:[#allocation2 + $0x678] sm:$0xff] 0.0
        %427 = vst [vmem:[#allocation2 + $0x680] sm:$0xff] 0.0
        %428 = vst [vmem:[#allocation2 + $0x688] sm:$0xff] 0.0
        %429 = vst [vmem:[#allocation2 + $0x690] sm:$0xff] 0.0
        %430 = vst [vmem:[#allocation2 + $0x698] sm:$0xff] 0.0
        %431 = vst [vmem:[#allocation2 + $0x6a0] sm:$0xff] 0.0
        %432 = vst [vmem:[#allocation2 + $0x6a8] sm:$0xff] 0.0
        %433 = vst [vmem:[#allocation2 + $0x6b0] sm:$0xff] 0.0
        %434 = vst [vmem:[#allocation2 + $0x6b8] sm:$0xff] 0.0
        %435 = vst [vmem:[#allocation2 + $0x6c0] sm:$0xff] 0.0
        %436 = vst [vmem:[#allocation2 + $0x6c8] sm:$0xff] 0.0
        %437 = vst [vmem:[#allocation2 + $0x6d0] sm:$0xff] 0.0
        %438 = vst [vmem:[#allocation2 + $0x6d8] sm:$0xff] 0.0
        %439 = vst [vmem:[#allocation2 + $0x6e0] sm:$0xff] 0.0
        %440 = vst [vmem:[#allocation2 + $0x6e8] sm:$0xff] 0.0
        %441 = vst [vmem:[#allocation2 + $0x6f0] sm:$0xff] 0.0
        %442 = vst [vmem:[#allocation2 + $0x6f8] sm:$0xff] 0.0
        %443 = vst [vmem:[#allocation2 + $0x700] sm:$0xff] 0.0
        %444 = vst [vmem:[#allocation2 + $0x708] sm:$0xff] 0.0
        %445 = vst [vmem:[#allocation2 + $0x710] sm:$0xff] 0.0
        %446 = vst [vmem:[#allocation2 + $0x718] sm:$0xff] 0.0
        %447 = vst [vmem:[#allocation2 + $0x720] sm:$0xff] 0.0
        %448 = vst [vmem:[#allocation2 + $0x728] sm:$0xff] 0.0
        %449 = vst [vmem:[#allocation2 + $0x730] sm:$0xff] 0.0
        %450 = vst [vmem:[#allocation2 + $0x738] sm:$0xff] 0.0
        %451 = vst [vmem:[#allocation2 + $0x740] sm:$0xff] 0.0
        %452 = vst [vmem:[#allocation2 + $0x748] sm:$0xff] 0.0
        %453 = vst [vmem:[#allocation2 + $0x750] sm:$0xff] 0.0
        %454 = vst [vmem:[#allocation2 + $0x758] sm:$0xff] 0.0
        %455 = vst [vmem:[#allocation2 + $0x760] sm:$0xff] 0.0
        %456 = vst [vmem:[#allocation2 + $0x768] sm:$0xff] 0.0
        %457 = vst [vmem:[#allocation2 + $0x770] sm:$0xff] 0.0
        %458 = vst [vmem:[#allocation2 + $0x778] sm:$0xff] 0.0
        %459 = vst [vmem:[#allocation2 + $0x780] sm:$0xff] 0.0
        %460 = vst [vmem:[#allocation2 + $0x788] sm:$0xff] 0.0
        %461 = vst [vmem:[#allocation2 + $0x790] sm:$0xff] 0.0
        %462 = vst [vmem:[#allocation2 + $0x798] sm:$0xff] 0.0
        %463 = vst [vmem:[#allocation2 + $0x7a0] sm:$0xff] 0.0
        %464 = vst [vmem:[#allocation2 + $0x7a8] sm:$0xff] 0.0
        %465 = vst [vmem:[#allocation2 + $0x7b0] sm:$0xff] 0.0
        %466 = vst [vmem:[#allocation2 + $0x7b8] sm:$0xff] 0.0
        %467 = vst [vmem:[#allocation2 + $0x7c0] sm:$0xff] 0.0
        %468 = vst [vmem:[#allocation2 + $0x7c8] sm:$0xff] 0.0
        %469 = vst [vmem:[#allocation2 + $0x7d0] sm:$0xff] 0.0
        %470 = vst [vmem:[#allocation2 + $0x7d8] sm:$0xff] 0.0
        %471 = vst [vmem:[#allocation2 + $0x7e0] sm:$0xff] 0.0
        %472 = vst [vmem:[#allocation2 + $0x7e8] sm:$0xff] 0.0
        %473 = vst [vmem:[#allocation2 + $0x7f0] sm:$0xff] 0.0
        %474 = vst [vmem:[#allocation2 + $0x7f8] sm:$0xff] 0.0
      $region32: #{adder2d_forward.1} parent=27 // pred_fallthru
        _
      loop: start=0, step=1, limit=8
      $region33: #{adder2d_forward.1} parent=27 // loop_pre_header
        _
      $region34: #{adder2d_forward.1} parent=27 // loop_header
        %s476 = sphi 0, %s480
        %p477 = scmp.ge.s32.totalorder %s476, 8
      $region35: #{adder2d_forward.1} parent=27 // loop_header_branch
        %479 = sbr.rel (%p477) target = $region39
      $region36: #{adder2d_forward.1} parent=27 // loop_body
        %s481 = scalar_lea.vmem %s204, %s476
        %v482 = vld [vmem:[%s481] sm:$0x1]
        %s483 = smul.u32 %s476, 256
        %v484 = vld [vmem:[%s196] sm:$0xff]
        %v485 = vld [vmem:[%s196 + $0x8] sm:$0xff]
        %v486 = vld [vmem:[%s196 + $0x10] sm:$0xff]
        %v487 = vld [vmem:[%s196 + $0x18] sm:$0xff]
        %v488 = vld [vmem:[%s196 + $0x20] sm:$0xff]
        %v489 = vld [vmem:[%s196 + $0x28] sm:$0xff]
        %v490 = vld [vmem:[%s196 + $0x30] sm:$0xff]
        %v491 = vld [vmem:[%s196 + $0x38] sm:$0xff]
        %v492 = vld [vmem:[%s196 + $0x40] sm:$0xff]
        %v493 = vld [vmem:[%s196 + $0x48] sm:$0xff]
        %v494 = vld [vmem:[%s196 + $0x50] sm:$0xff]
        %v495 = vld [vmem:[%s196 + $0x58] sm:$0xff]
        %v496 = vld [vmem:[%s196 + $0x60] sm:$0xff]
        %v497 = vld [vmem:[%s196 + $0x68] sm:$0xff]
        %v498 = vld [vmem:[%s196 + $0x70] sm:$0xff]
        %v499 = vld [vmem:[%s196 + $0x78] sm:$0xff]
        %v500 = vperm.slane %v482, 0
        %v501 = vsub.f32 %v484, %v500
        %v502 = vsub.f32 %v485, %v500
        %v503 = vsub.f32 %v486, %v500
        %v504 = vsub.f32 %v487, %v500
        %v505 = vsub.f32 %v488, %v500
        %v506 = vsub.f32 %v489, %v500
        %v507 = vsub.f32 %v490, %v500
        %v508 = vsub.f32 %v491, %v500
        %v509 = vsub.f32 %v492, %v500
        %v510 = vsub.f32 %v493, %v500
        %v511 = vsub.f32 %v494, %v500
        %v512 = vsub.f32 %v495, %v500
        %v513 = vsub.f32 %v496, %v500
        %v514 = vsub.f32 %v497, %v500
        %v515 = vsub.f32 %v498, %v500
        %v516 = vsub.f32 %v499, %v500
        %v517 = vand.u32 2147483647, %v501
        %v518 = vand.u32 2147483647, %v502
        %v519 = vand.u32 2147483647, %v503
        %v520 = vand.u32 2147483647, %v504
        %v521 = vand.u32 2147483647, %v505
        %v522 = vand.u32 2147483647, %v506
        %v523 = vand.u32 2147483647, %v507
        %v524 = vand.u32 2147483647, %v508
        %v525 = vand.u32 2147483647, %v509
        %v526 = vand.u32 2147483647, %v510
        %v527 = vand.u32 2147483647, %v511
        %v528 = vand.u32 2147483647, %v512
        %v529 = vand.u32 2147483647, %v513
        %v530 = vand.u32 2147483647, %v514
        %v531 = vand.u32 2147483647, %v515
        %v532 = vand.u32 2147483647, %v516
        %s533 = sadd.s32 %s483, 0
        %s534 = scalar_lea.vmem [#allocation2], %s533
        %v535 = vld [vmem:[%s534] sm:$0xff]
        %v536 = vld [vmem:[%s534 + $0x8] sm:$0xff]
        %v537 = vld [vmem:[%s534 + $0x10] sm:$0xff]
        %v538 = vld [vmem:[%s534 + $0x18] sm:$0xff]
        %v539 = vld [vmem:[%s534 + $0x20] sm:$0xff]
        %v540 = vld [vmem:[%s534 + $0x28] sm:$0xff]
        %v541 = vld [vmem:[%s534 + $0x30] sm:$0xff]
        %v542 = vld [vmem:[%s534 + $0x38] sm:$0xff]
        %v543 = vld [vmem:[%s534 + $0x40] sm:$0xff]
        %v544 = vld [vmem:[%s534 + $0x48] sm:$0xff]
        %v545 = vld [vmem:[%s534 + $0x50] sm:$0xff]
        %v546 = vld [vmem:[%s534 + $0x58] sm:$0xff]
        %v547 = vld [vmem:[%s534 + $0x60] sm:$0xff]
        %v548 = vld [vmem:[%s534 + $0x68] sm:$0xff]
        %v549 = vld [vmem:[%s534 + $0x70] sm:$0xff]
        %v550 = vld [vmem:[%s534 + $0x78] sm:$0xff]
        %v551 = vadd.f32 %v535, %v517
        %v552 = vadd.f32 %v536, %v518
        %v553 = vadd.f32 %v537, %v519
        %v554 = vadd.f32 %v538, %v520
        %v555 = vadd.f32 %v539, %v521
        %v556 = vadd.f32 %v540, %v522
        %v557 = vadd.f32 %v541, %v523
        %v558 = vadd.f32 %v542, %v524
        %v559 = vadd.f32 %v543, %v525
        %v560 = vadd.f32 %v544, %v526
        %v561 = vadd.f32 %v545, %v527
        %v562 = vadd.f32 %v546, %v528
        %v563 = vadd.f32 %v547, %v529
        %v564 = vadd.f32 %v548, %v530
        %v565 = vadd.f32 %v549, %v531
        %v566 = vadd.f32 %v550, %v532
        %567 = vst [vmem:[%s534] sm:$0xff] %v551
        %568 = vst [vmem:[%s534 + $0x8] sm:$0xff] %v552
        %569 = vst [vmem:[%s534 + $0x10] sm:$0xff] %v553
        %570 = vst [vmem:[%s534 + $0x18] sm:$0xff] %v554
        %571 = vst [vmem:[%s534 + $0x20] sm:$0xff] %v555
        %572 = vst [vmem:[%s534 + $0x28] sm:$0xff] %v556
        %573 = vst [vmem:[%s534 + $0x30] sm:$0xff] %v557
        %574 = vst [vmem:[%s534 + $0x38] sm:$0xff] %v558
        %575 = vst [vmem:[%s534 + $0x40] sm:$0xff] %v559
        %576 = vst [vmem:[%s534 + $0x48] sm:$0xff] %v560
        %577 = vst [vmem:[%s534 + $0x50] sm:$0xff] %v561
        %578 = vst [vmem:[%s534 + $0x58] sm:$0xff] %v562
        %579 = vst [vmem:[%s534 + $0x60] sm:$0xff] %v563
        %580 = vst [vmem:[%s534 + $0x68] sm:$0xff] %v564
        %581 = vst [vmem:[%s534 + $0x70] sm:$0xff] %v565
        %582 = vst [vmem:[%s534 + $0x78] sm:$0xff] %v566
        %s583 = scalar_lea.vmem %s196, 128
        %v584 = vld [vmem:[%s583] sm:$0xff]
        %v585 = vld [vmem:[%s583 + $0x8] sm:$0xff]
        %v586 = vld [vmem:[%s583 + $0x10] sm:$0xff]
        %v587 = vld [vmem:[%s583 + $0x18] sm:$0xff]
        %v588 = vld [vmem:[%s583 + $0x20] sm:$0xff]
        %v589 = vld [vmem:[%s583 + $0x28] sm:$0xff]
        %v590 = vld [vmem:[%s583 + $0x30] sm:$0xff]
        %v591 = vld [vmem:[%s583 + $0x38] sm:$0xff]
        %v592 = vld [vmem:[%s583 + $0x40] sm:$0xff]
        %v593 = vld [vmem:[%s583 + $0x48] sm:$0xff]
        %v594 = vld [vmem:[%s583 + $0x50] sm:$0xff]
        %v595 = vld [vmem:[%s583 + $0x58] sm:$0xff]
        %v596 = vld [vmem:[%s583 + $0x60] sm:$0xff]
        %v597 = vld [vmem:[%s583 + $0x68] sm:$0xff]
        %v598 = vld [vmem:[%s583 + $0x70] sm:$0xff]
        %v599 = vld [vmem:[%s583 + $0x78] sm:$0xff]
        %v600 = vsub.f32 %v584, %v500
        %v601 = vsub.f32 %v585, %v500
        %v602 = vsub.f32 %v586, %v500
        %v603 = vsub.f32 %v587, %v500
        %v604 = vsub.f32 %v588, %v500
        %v605 = vsub.f32 %v589, %v500
        %v606 = vsub.f32 %v590, %v500
        %v607 = vsub.f32 %v591, %v500
        %v608 = vsub.f32 %v592, %v500
        %v609 = vsub.f32 %v593, %v500
        %v610 = vsub.f32 %v594, %v500
        %v611 = vsub.f32 %v595, %v500
        %v612 = vsub.f32 %v596, %v500
        %v613 = vsub.f32 %v597, %v500
        %v614 = vsub.f32 %v598, %v500
        %v615 = vsub.f32 %v599, %v500
        %v616 = vand.u32 2147483647, %v600
        %v617 = vand.u32 2147483647, %v601
        %v618 = vand.u32 2147483647, %v602
        %v619 = vand.u32 2147483647, %v603
        %v620 = vand.u32 2147483647, %v604
        %v621 = vand.u32 2147483647, %v605
        %v622 = vand.u32 2147483647, %v606
        %v623 = vand.u32 2147483647, %v607
        %v624 = vand.u32 2147483647, %v608
        %v625 = vand.u32 2147483647, %v609
        %v626 = vand.u32 2147483647, %v610
        %v627 = vand.u32 2147483647, %v611
        %v628 = vand.u32 2147483647, %v612
        %v629 = vand.u32 2147483647, %v613
        %v630 = vand.u32 2147483647, %v614
        %v631 = vand.u32 2147483647, %v615
        %s632 = sadd.s32 %s483, 128
        %s633 = scalar_lea.vmem [#allocation2], %s632
        %v634 = vld [vmem:[%s633] sm:$0xff]
        %v635 = vld [vmem:[%s633 + $0x8] sm:$0xff]
        %v636 = vld [vmem:[%s633 + $0x10] sm:$0xff]
        %v637 = vld [vmem:[%s633 + $0x18] sm:$0xff]
        %v638 = vld [vmem:[%s633 + $0x20] sm:$0xff]
        %v639 = vld [vmem:[%s633 + $0x28] sm:$0xff]
        %v640 = vld [vmem:[%s633 + $0x30] sm:$0xff]
        %v641 = vld [vmem:[%s633 + $0x38] sm:$0xff]
        %v642 = vld [vmem:[%s633 + $0x40] sm:$0xff]
        %v643 = vld [vmem:[%s633 + $0x48] sm:$0xff]
        %v644 = vld [vmem:[%s633 + $0x50] sm:$0xff]
        %v645 = vld [vmem:[%s633 + $0x58] sm:$0xff]
        %v646 = vld [vmem:[%s633 + $0x60] sm:$0xff]
        %v647 = vld [vmem:[%s633 + $0x68] sm:$0xff]
        %v648 = vld [vmem:[%s633 + $0x70] sm:$0xff]
        %v649 = vld [vmem:[%s633 + $0x78] sm:$0xff]
        %v650 = vadd.f32 %v634, %v616
        %v651 = vadd.f32 %v635, %v617
        %v652 = vadd.f32 %v636, %v618
        %v653 = vadd.f32 %v637, %v619
        %v654 = vadd.f32 %v638, %v620
        %v655 = vadd.f32 %v639, %v621
        %v656 = vadd.f32 %v640, %v622
        %v657 = vadd.f32 %v641, %v623
        %v658 = vadd.f32 %v642, %v624
        %v659 = vadd.f32 %v643, %v625
        %v660 = vadd.f32 %v644, %v626
        %v661 = vadd.f32 %v645, %v627
        %v662 = vadd.f32 %v646, %v628
        %v663 = vadd.f32 %v647, %v629
        %v664 = vadd.f32 %v648, %v630
        %v665 = vadd.f32 %v649, %v631
        %666 = vst [vmem:[%s633] sm:$0xff] %v650
        %667 = vst [vmem:[%s633 + $0x8] sm:$0xff] %v651
        %668 = vst [vmem:[%s633 + $0x10] sm:$0xff] %v652
        %669 = vst [vmem:[%s633 + $0x18] sm:$0xff] %v653
        %670 = vst [vmem:[%s633 + $0x20] sm:$0xff] %v654
        %671 = vst [vmem:[%s633 + $0x28] sm:$0xff] %v655
        %672 = vst [vmem:[%s633 + $0x30] sm:$0xff] %v656
        %673 = vst [vmem:[%s633 + $0x38] sm:$0xff] %v657
        %674 = vst [vmem:[%s633 + $0x40] sm:$0xff] %v658
        %675 = vst [vmem:[%s633 + $0x48] sm:$0xff] %v659
        %676 = vst [vmem:[%s633 + $0x50] sm:$0xff] %v660
        %677 = vst [vmem:[%s633 + $0x58] sm:$0xff] %v661
        %678 = vst [vmem:[%s633 + $0x60] sm:$0xff] %v662
        %679 = vst [vmem:[%s633 + $0x68] sm:$0xff] %v663
        %680 = vst [vmem:[%s633 + $0x70] sm:$0xff] %v664
        %681 = vst [vmem:[%s633 + $0x78] sm:$0xff] %v665
      $region37: #{adder2d_forward.1} parent=27 // loop_footer
        %s480 = sadd.s32 1, %s476
      $region38: #{adder2d_forward.1} parent=27 // loop_footer_branch
        %475 = sbr.rel target = $region34
      $region39: #{adder2d_forward.1} parent=27 // loop_exit
        _
      // Predicated region
      $region40: #{adder2d_forward.1} parent=27 // pred_check
        %p682 = pneg %p215
      $region41: #{adder2d_forward.1} parent=27 // pred_check_branch
        %684 = sbr.rel (%p682) target = $region43
      $region42: #{adder2d_forward.1} parent=27 // pred_region
        %v685 = vld [vmem:[#allocation2] sm:$0xff]
        %v686 = vld [vmem:[#allocation2 + $0x8] sm:$0xff]
        %v687 = vld [vmem:[#allocation2 + $0x10] sm:$0xff]
        %v688 = vld [vmem:[#allocation2 + $0x18] sm:$0xff]
        %v689 = vld [vmem:[#allocation2 + $0x20] sm:$0xff]
        %v690 = vld [vmem:[#allocation2 + $0x28] sm:$0xff]
        %v691 = vld [vmem:[#allocation2 + $0x30] sm:$0xff]
        %v692 = vld [vmem:[#allocation2 + $0x38] sm:$0xff]
        %v693 = vld [vmem:[#allocation2 + $0x40] sm:$0xff]
        %v694 = vld [vmem:[#allocation2 + $0x48] sm:$0xff]
        %v695 = vld [vmem:[#allocation2 + $0x50] sm:$0xff]
        %v696 = vld [vmem:[#allocation2 + $0x58] sm:$0xff]
        %v697 = vld [vmem:[#allocation2 + $0x60] sm:$0xff]
        %v698 = vld [vmem:[#allocation2 + $0x68] sm:$0xff]
        %v699 = vld [vmem:[#allocation2 + $0x70] sm:$0xff]
        %v700 = vld [vmem:[#allocation2 + $0x78] sm:$0xff]
        %v701 = vld [vmem:[#allocation2 + $0x80] sm:$0xff]
        %v702 = vld [vmem:[#allocation2 + $0x88] sm:$0xff]
        %v703 = vld [vmem:[#allocation2 + $0x90] sm:$0xff]
        %v704 = vld [vmem:[#allocation2 + $0x98] sm:$0xff]
        %v705 = vld [vmem:[#allocation2 + $0xa0] sm:$0xff]
        %v706 = vld [vmem:[#allocation2 + $0xa8] sm:$0xff]
        %v707 = vld [vmem:[#allocation2 + $0xb0] sm:$0xff]
        %v708 = vld [vmem:[#allocation2 + $0xb8] sm:$0xff]
        %v709 = vld [vmem:[#allocation2 + $0xc0] sm:$0xff]
        %v710 = vld [vmem:[#allocation2 + $0xc8] sm:$0xff]
        %v711 = vld [vmem:[#allocation2 + $0xd0] sm:$0xff]
        %v712 = vld [vmem:[#allocation2 + $0xd8] sm:$0xff]
        %v713 = vld [vmem:[#allocation2 + $0xe0] sm:$0xff]
        %v714 = vld [vmem:[#allocation2 + $0xe8] sm:$0xff]
        %v715 = vld [vmem:[#allocation2 + $0xf0] sm:$0xff]
        %v716 = vld [vmem:[#allocation2 + $0xf8] sm:$0xff]
        %717 = vadd.xlane.f32.xlu0 %v685
        %v718 = vpop.xlane.xlu0 %717
        %719 = vadd.xlane.f32.xlu0 %v686
        %v720 = vpop.xlane.xlu0 %719
        %721 = vadd.xlane.f32.xlu0 %v687
        %v722 = vpop.xlane.xlu0 %721
        %723 = vadd.xlane.f32.xlu0 %v688
        %v724 = vpop.xlane.xlu0 %723
        %725 = vadd.xlane.f32.xlu0 %v689
        %v726 = vpop.xlane.xlu0 %725
        %727 = vadd.xlane.f32.xlu0 %v690
        %v728 = vpop.xlane.xlu0 %727
        %729 = vadd.xlane.f32.xlu0 %v691
        %v730 = vpop.xlane.xlu0 %729
        %731 = vadd.xlane.f32.xlu0 %v692
        %v732 = vpop.xlane.xlu0 %731
        %733 = vadd.xlane.f32.xlu0 %v693
        %v734 = vpop.xlane.xlu0 %733
        %735 = vadd.xlane.f32.xlu0 %v694
        %v736 = vpop.xlane.xlu0 %735
        %737 = vadd.xlane.f32.xlu0 %v695
        %v738 = vpop.xlane.xlu0 %737
        %739 = vadd.xlane.f32.xlu0 %v696
        %v740 = vpop.xlane.xlu0 %739
        %741 = vadd.xlane.f32.xlu0 %v697
        %v742 = vpop.xlane.xlu0 %741
        %743 = vadd.xlane.f32.xlu0 %v698
        %v744 = vpop.xlane.xlu0 %743
        %745 = vadd.xlane.f32.xlu0 %v699
        %v746 = vpop.xlane.xlu0 %745
        %747 = vadd.xlane.f32.xlu0 %v700
        %v748 = vpop.xlane.xlu0 %747
        %749 = vadd.xlane.f32.xlu0 %v701
        %v750 = vpop.xlane.xlu0 %749
        %751 = vadd.xlane.f32.xlu0 %v702
        %v752 = vpop.xlane.xlu0 %751
        %753 = vadd.xlane.f32.xlu0 %v703
        %v754 = vpop.xlane.xlu0 %753
        %755 = vadd.xlane.f32.xlu0 %v704
        %v756 = vpop.xlane.xlu0 %755
        %757 = vadd.xlane.f32.xlu0 %v705
        %v758 = vpop.xlane.xlu0 %757
        %759 = vadd.xlane.f32.xlu0 %v706
        %v760 = vpop.xlane.xlu0 %759
        %761 = vadd.xlane.f32.xlu0 %v707
        %v762 = vpop.xlane.xlu0 %761
        %763 = vadd.xlane.f32.xlu0 %v708
        %v764 = vpop.xlane.xlu0 %763
        %765 = vadd.xlane.f32.xlu0 %v709
        %v766 = vpop.xlane.xlu0 %765
        %767 = vadd.xlane.f32.xlu0 %v710
        %v768 = vpop.xlane.xlu0 %767
        %769 = vadd.xlane.f32.xlu0 %v711
        %v770 = vpop.xlane.xlu0 %769
        %771 = vadd.xlane.f32.xlu0 %v712
        %v772 = vpop.xlane.xlu0 %771
        %773 = vadd.xlane.f32.xlu0 %v713
        %v774 = vpop.xlane.xlu0 %773
        %775 = vadd.xlane.f32.xlu0 %v714
        %v776 = vpop.xlane.xlu0 %775
        %777 = vadd.xlane.f32.xlu0 %v715
        %v778 = vpop.xlane.xlu0 %777
        %779 = vadd.xlane.f32.xlu0 %v716
        %v780 = vpop.xlane.xlu0 %779
        %v781 = vsub.f32 0.0, %v718
        %v782 = vsub.f32 0.0, %v720
        %v783 = vsub.f32 0.0, %v722
        %v784 = vsub.f32 0.0, %v724
        %v785 = vsub.f32 0.0, %v726
        %v786 = vsub.f32 0.0, %v728
        %v787 = vsub.f32 0.0, %v730
        %v788 = vsub.f32 0.0, %v732
        %v789 = vsub.f32 0.0, %v734
        %v790 = vsub.f32 0.0, %v736
        %v791 = vsub.f32 0.0, %v738
        %v792 = vsub.f32 0.0, %v740
        %v793 = vsub.f32 0.0, %v742
        %v794 = vsub.f32 0.0, %v744
        %v795 = vsub.f32 0.0, %v746
        %v796 = vsub.f32 0.0, %v748
        %v797 = vsub.f32 0.0, %v750
        %v798 = vsub.f32 0.0, %v752
        %v799 = vsub.f32 0.0, %v754
        %v800 = vsub.f32 0.0, %v756
        %v801 = vsub.f32 0.0, %v758
        %v802 = vsub.f32 0.0, %v760
        %v803 = vsub.f32 0.0, %v762
        %v804 = vsub.f32 0.0, %v764
        %v805 = vsub.f32 0.0, %v766
        %v806 = vsub.f32 0.0, %v768
        %v807 = vsub.f32 0.0, %v770
        %v808 = vsub.f32 0.0, %v772
        %v809 = vsub.f32 0.0, %v774
        %v810 = vsub.f32 0.0, %v776
        %v811 = vsub.f32 0.0, %v778
        %v812 = vsub.f32 0.0, %v780
        %vm813 = vcmask 7168
        %814 = vst.msk [vmem:[%s213] sm:$0xff] %vm813, %v781
        %815 = vst.msk [vmem:[%s213 + $0x8] sm:$0xff] %vm813, %v782
        %816 = vst.msk [vmem:[%s213 + $0x10] sm:$0xff] %vm813, %v783
        %817 = vst.msk [vmem:[%s213 + $0x18] sm:$0xff] %vm813, %v784
        %818 = vst.msk [vmem:[%s213 + $0x20] sm:$0xff] %vm813, %v785
        %819 = vst.msk [vmem:[%s213 + $0x28] sm:$0xff] %vm813, %v786
        %820 = vst.msk [vmem:[%s213 + $0x30] sm:$0xff] %vm813, %v787
        %821 = vst.msk [vmem:[%s213 + $0x38] sm:$0xff] %vm813, %v788
        %822 = vst.msk [vmem:[%s213 + $0x40] sm:$0xff] %vm813, %v789
        %823 = vst.msk [vmem:[%s213 + $0x48] sm:$0xff] %vm813, %v790
        %824 = vst.msk [vmem:[%s213 + $0x50] sm:$0xff] %vm813, %v791
        %825 = vst.msk [vmem:[%s213 + $0x58] sm:$0xff] %vm813, %v792
        %826 = vst.msk [vmem:[%s213 + $0x60] sm:$0xff] %vm813, %v793
        %827 = vst.msk [vmem:[%s213 + $0x68] sm:$0xff] %vm813, %v794
        %828 = vst.msk [vmem:[%s213 + $0x70] sm:$0xff] %vm813, %v795
        %829 = vst.msk [vmem:[%s213 + $0x78] sm:$0xff] %vm813, %v796
        %830 = vst.msk [vmem:[%s213 + $0x80] sm:$0xff] %vm813, %v797
        %831 = vst.msk [vmem:[%s213 + $0x88] sm:$0xff] %vm813, %v798
        %832 = vst.msk [vmem:[%s213 + $0x90] sm:$0xff] %vm813, %v799
        %833 = vst.msk [vmem:[%s213 + $0x98] sm:$0xff] %vm813, %v800
        %834 = vst.msk [vmem:[%s213 + $0xa0] sm:$0xff] %vm813, %v801
        %835 = vst.msk [vmem:[%s213 + $0xa8] sm:$0xff] %vm813, %v802
        %836 = vst.msk [vmem:[%s213 + $0xb0] sm:$0xff] %vm813, %v803
        %837 = vst.msk [vmem:[%s213 + $0xb8] sm:$0xff] %vm813, %v804
        %838 = vst.msk [vmem:[%s213 + $0xc0] sm:$0xff] %vm813, %v805
        %839 = vst.msk [vmem:[%s213 + $0xc8] sm:$0xff] %vm813, %v806
        %840 = vst.msk [vmem:[%s213 + $0xd0] sm:$0xff] %vm813, %v807
        %841 = vst.msk [vmem:[%s213 + $0xd8] sm:$0xff] %vm813, %v808
        %842 = vst.msk [vmem:[%s213 + $0xe0] sm:$0xff] %vm813, %v809
        %843 = vst.msk [vmem:[%s213 + $0xe8] sm:$0xff] %vm813, %v810
        %844 = vst.msk [vmem:[%s213 + $0xf0] sm:$0xff] %vm813, %v811
        %845 = vst.msk [vmem:[%s213 + $0xf8] sm:$0xff] %vm813, %v812
        %v846 = vld [vmem:[#allocation2 + $0x100] sm:$0xff]
        %v847 = vld [vmem:[#allocation2 + $0x108] sm:$0xff]
        %v848 = vld [vmem:[#allocation2 + $0x110] sm:$0xff]
        %v849 = vld [vmem:[#allocation2 + $0x118] sm:$0xff]
        %v850 = vld [vmem:[#allocation2 + $0x120] sm:$0xff]
        %v851 = vld [vmem:[#allocation2 + $0x128] sm:$0xff]
        %v852 = vld [vmem:[#allocation2 + $0x130] sm:$0xff]
        %v853 = vld [vmem:[#allocation2 + $0x138] sm:$0xff]
        %v854 = vld [vmem:[#allocation2 + $0x140] sm:$0xff]
        %v855 = vld [vmem:[#allocation2 + $0x148] sm:$0xff]
        %v856 = vld [vmem:[#allocation2 + $0x150] sm:$0xff]
        %v857 = vld [vmem:[#allocation2 + $0x158] sm:$0xff]
        %v858 = vld [vmem:[#allocation2 + $0x160] sm:$0xff]
        %v859 = vld [vmem:[#allocation2 + $0x168] sm:$0xff]
        %v860 = vld [vmem:[#allocation2 + $0x170] sm:$0xff]
        %v861 = vld [vmem:[#allocation2 + $0x178] sm:$0xff]
        %v862 = vld [vmem:[#allocation2 + $0x180] sm:$0xff]
        %v863 = vld [vmem:[#allocation2 + $0x188] sm:$0xff]
        %v864 = vld [vmem:[#allocation2 + $0x190] sm:$0xff]
        %v865 = vld [vmem:[#allocation2 + $0x198] sm:$0xff]
        %v866 = vld [vmem:[#allocation2 + $0x1a0] sm:$0xff]
        %v867 = vld [vmem:[#allocation2 + $0x1a8] sm:$0xff]
        %v868 = vld [vmem:[#allocation2 + $0x1b0] sm:$0xff]
        %v869 = vld [vmem:[#allocation2 + $0x1b8] sm:$0xff]
        %v870 = vld [vmem:[#allocation2 + $0x1c0] sm:$0xff]
        %v871 = vld [vmem:[#allocation2 + $0x1c8] sm:$0xff]
        %v872 = vld [vmem:[#allocation2 + $0x1d0] sm:$0xff]
        %v873 = vld [vmem:[#allocation2 + $0x1d8] sm:$0xff]
        %v874 = vld [vmem:[#allocation2 + $0x1e0] sm:$0xff]
        %v875 = vld [vmem:[#allocation2 + $0x1e8] sm:$0xff]
        %v876 = vld [vmem:[#allocation2 + $0x1f0] sm:$0xff]
        %v877 = vld [vmem:[#allocation2 + $0x1f8] sm:$0xff]
        %878 = vadd.xlane.f32.xlu0 %v846
        %v879 = vpop.xlane.xlu0 %878
        %880 = vadd.xlane.f32.xlu0 %v847
        %v881 = vpop.xlane.xlu0 %880
        %882 = vadd.xlane.f32.xlu0 %v848
        %v883 = vpop.xlane.xlu0 %882
        %884 = vadd.xlane.f32.xlu0 %v849
        %v885 = vpop.xlane.xlu0 %884
        %886 = vadd.xlane.f32.xlu0 %v850
        %v887 = vpop.xlane.xlu0 %886
        %888 = vadd.xlane.f32.xlu0 %v851
        %v889 = vpop.xlane.xlu0 %888
        %890 = vadd.xlane.f32.xlu0 %v852
        %v891 = vpop.xlane.xlu0 %890
        %892 = vadd.xlane.f32.xlu0 %v853
        %v893 = vpop.xlane.xlu0 %892
        %894 = vadd.xlane.f32.xlu0 %v854
        %v895 = vpop.xlane.xlu0 %894
        %896 = vadd.xlane.f32.xlu0 %v855
        %v897 = vpop.xlane.xlu0 %896
        %898 = vadd.xlane.f32.xlu0 %v856
        %v899 = vpop.xlane.xlu0 %898
        %900 = vadd.xlane.f32.xlu0 %v857
        %v901 = vpop.xlane.xlu0 %900
        %902 = vadd.xlane.f32.xlu0 %v858
        %v903 = vpop.xlane.xlu0 %902
        %904 = vadd.xlane.f32.xlu0 %v859
        %v905 = vpop.xlane.xlu0 %904
        %906 = vadd.xlane.f32.xlu0 %v860
        %v907 = vpop.xlane.xlu0 %906
        %908 = vadd.xlane.f32.xlu0 %v861
        %v909 = vpop.xlane.xlu0 %908
        %910 = vadd.xlane.f32.xlu0 %v862
        %v911 = vpop.xlane.xlu0 %910
        %912 = vadd.xlane.f32.xlu0 %v863
        %v913 = vpop.xlane.xlu0 %912
        %914 = vadd.xlane.f32.xlu0 %v864
        %v915 = vpop.xlane.xlu0 %914
        %916 = vadd.xlane.f32.xlu0 %v865
        %v917 = vpop.xlane.xlu0 %916
        %918 = vadd.xlane.f32.xlu0 %v866
        %v919 = vpop.xlane.xlu0 %918
        %920 = vadd.xlane.f32.xlu0 %v867
        %v921 = vpop.xlane.xlu0 %920
        %922 = vadd.xlane.f32.xlu0 %v868
        %v923 = vpop.xlane.xlu0 %922
        %924 = vadd.xlane.f32.xlu0 %v869
        %v925 = vpop.xlane.xlu0 %924
        %926 = vadd.xlane.f32.xlu0 %v870
        %v927 = vpop.xlane.xlu0 %926
        %928 = vadd.xlane.f32.xlu0 %v871
        %v929 = vpop.xlane.xlu0 %928
        %930 = vadd.xlane.f32.xlu0 %v872
        %v931 = vpop.xlane.xlu0 %930
        %932 = vadd.xlane.f32.xlu0 %v873
        %v933 = vpop.xlane.xlu0 %932
        %934 = vadd.xlane.f32.xlu0 %v874
        %v935 = vpop.xlane.xlu0 %934
        %936 = vadd.xlane.f32.xlu0 %v875
        %v937 = vpop.xlane.xlu0 %936
        %938 = vadd.xlane.f32.xlu0 %v876
        %v939 = vpop.xlane.xlu0 %938
        %940 = vadd.xlane.f32.xlu0 %v877
        %v941 = vpop.xlane.xlu0 %940
        %v942 = vsub.f32 0.0, %v879
        %v943 = vsub.f32 0.0, %v881
        %v944 = vsub.f32 0.0, %v883
        %v945 = vsub.f32 0.0, %v885
        %v946 = vsub.f32 0.0, %v887
        %v947 = vsub.f32 0.0, %v889
        %v948 = vsub.f32 0.0, %v891
        %v949 = vsub.f32 0.0, %v893
        %v950 = vsub.f32 0.0, %v895
        %v951 = vsub.f32 0.0, %v897
        %v952 = vsub.f32 0.0, %v899
        %v953 = vsub.f32 0.0, %v901
        %v954 = vsub.f32 0.0, %v903
        %v955 = vsub.f32 0.0, %v905
        %v956 = vsub.f32 0.0, %v907
        %v957 = vsub.f32 0.0, %v909
        %v958 = vsub.f32 0.0, %v911
        %v959 = vsub.f32 0.0, %v913
        %v960 = vsub.f32 0.0, %v915
        %v961 = vsub.f32 0.0, %v917
        %v962 = vsub.f32 0.0, %v919
        %v963 = vsub.f32 0.0, %v921
        %v964 = vsub.f32 0.0, %v923
        %v965 = vsub.f32 0.0, %v925
        %v966 = vsub.f32 0.0, %v927
        %v967 = vsub.f32 0.0, %v929
        %v968 = vsub.f32 0.0, %v931
        %v969 = vsub.f32 0.0, %v933
        %v970 = vsub.f32 0.0, %v935
        %v971 = vsub.f32 0.0, %v937
        %v972 = vsub.f32 0.0, %v939
        %v973 = vsub.f32 0.0, %v941
        %vm974 = vcmask 15368
        %975 = vst.msk [vmem:[%s213] sm:$0xff] %vm974, %v942
        %976 = vst.msk [vmem:[%s213 + $0x8] sm:$0xff] %vm974, %v943
        %977 = vst.msk [vmem:[%s213 + $0x10] sm:$0xff] %vm974, %v944
        %978 = vst.msk [vmem:[%s213 + $0x18] sm:$0xff] %vm974, %v945
        %979 = vst.msk [vmem:[%s213 + $0x20] sm:$0xff] %vm974, %v946
        %980 = vst.msk [vmem:[%s213 + $0x28] sm:$0xff] %vm974, %v947
        %981 = vst.msk [vmem:[%s213 + $0x30] sm:$0xff] %vm974, %v948
        %982 = vst.msk [vmem:[%s213 + $0x38] sm:$0xff] %vm974, %v949
        %983 = vst.msk [vmem:[%s213 + $0x40] sm:$0xff] %vm974, %v950
        %984 = vst.msk [vmem:[%s213 + $0x48] sm:$0xff] %vm974, %v951
        %985 = vst.msk [vmem:[%s213 + $0x50] sm:$0xff] %vm974, %v952
        %986 = vst.msk [vmem:[%s213 + $0x58] sm:$0xff] %vm974, %v953
        %987 = vst.msk [vmem:[%s213 + $0x60] sm:$0xff] %vm974, %v954
        %988 = vst.msk [vmem:[%s213 + $0x68] sm:$0xff] %vm974, %v955
        %989 = vst.msk [vmem:[%s213 + $0x70] sm:$0xff] %vm974, %v956
        %990 = vst.msk [vmem:[%s213 + $0x78] sm:$0xff] %vm974, %v957
        %991 = vst.msk [vmem:[%s213 + $0x80] sm:$0xff] %vm974, %v958
        %992 = vst.msk [vmem:[%s213 + $0x88] sm:$0xff] %vm974, %v959
        %993 = vst.msk [vmem:[%s213 + $0x90] sm:$0xff] %vm974, %v960
        %994 = vst.msk [vmem:[%s213 + $0x98] sm:$0xff] %vm974, %v961
        %995 = vst.msk [vmem:[%s213 + $0xa0] sm:$0xff] %vm974, %v962
        %996 = vst.msk [vmem:[%s213 + $0xa8] sm:$0xff] %vm974, %v963
        %997 = vst.msk [vmem:[%s213 + $0xb0] sm:$0xff] %vm974, %v964
        %998 = vst.msk [vmem:[%s213 + $0xb8] sm:$0xff] %vm974, %v965
        %999 = vst.msk [vmem:[%s213 + $0xc0] sm:$0xff] %vm974, %v966
        %1000 = vst.msk [vmem:[%s213 + $0xc8] sm:$0xff] %vm974, %v967
        %1001 = vst.msk [vmem:[%s213 + $0xd0] sm:$0xff] %vm974, %v968
        %1002 = vst.msk [vmem:[%s213 + $0xd8] sm:$0xff] %vm974, %v969
        %1003 = vst.msk [vmem:[%s213 + $0xe0] sm:$0xff] %vm974, %v970
        %1004 = vst.msk [vmem:[%s213 + $0xe8] sm:$0xff] %vm974, %v971
        %1005 = vst.msk [vmem:[%s213 + $0xf0] sm:$0xff] %vm974, %v972
        %1006 = vst.msk [vmem:[%s213 + $0xf8] sm:$0xff] %vm974, %v973
        %v1007 = vld [vmem:[#allocation2 + $0x200] sm:$0xff]
        %v1008 = vld [vmem:[#allocation2 + $0x208] sm:$0xff]
        %v1009 = vld [vmem:[#allocation2 + $0x210] sm:$0xff]
        %v1010 = vld [vmem:[#allocation2 + $0x218] sm:$0xff]
        %v1011 = vld [vmem:[#allocation2 + $0x220] sm:$0xff]
        %v1012 = vld [vmem:[#allocation2 + $0x228] sm:$0xff]
        %v1013 = vld [vmem:[#allocation2 + $0x230] sm:$0xff]
        %v1014 = vld [vmem:[#allocation2 + $0x238] sm:$0xff]
        %v1015 = vld [vmem:[#allocation2 + $0x240] sm:$0xff]
        %v1016 = vld [vmem:[#allocation2 + $0x248] sm:$0xff]
        %v1017 = vld [vmem:[#allocation2 + $0x250] sm:$0xff]
        %v1018 = vld [vmem:[#allocation2 + $0x258] sm:$0xff]
        %v1019 = vld [vmem:[#allocation2 + $0x260] sm:$0xff]
        %v1020 = vld [vmem:[#allocation2 + $0x268] sm:$0xff]
        %v1021 = vld [vmem:[#allocation2 + $0x270] sm:$0xff]
        %v1022 = vld [vmem:[#allocation2 + $0x278] sm:$0xff]
        %v1023 = vld [vmem:[#allocation2 + $0x280] sm:$0xff]
        %v1024 = vld [vmem:[#allocation2 + $0x288] sm:$0xff]
        %v1025 = vld [vmem:[#allocation2 + $0x290] sm:$0xff]
        %v1026 = vld [vmem:[#allocation2 + $0x298] sm:$0xff]
        %v1027 = vld [vmem:[#allocation2 + $0x2a0] sm:$0xff]
        %v1028 = vld [vmem:[#allocation2 + $0x2a8] sm:$0xff]
        %v1029 = vld [vmem:[#allocation2 + $0x2b0] sm:$0xff]
        %v1030 = vld [vmem:[#allocation2 + $0x2b8] sm:$0xff]
        %v1031 = vld [vmem:[#allocation2 + $0x2c0] sm:$0xff]
        %v1032 = vld [vmem:[#allocation2 + $0x2c8] sm:$0xff]
        %v1033 = vld [vmem:[#allocation2 + $0x2d0] sm:$0xff]
        %v1034 = vld [vmem:[#allocation2 + $0x2d8] sm:$0xff]
        %v1035 = vld [vmem:[#allocation2 + $0x2e0] sm:$0xff]
        %v1036 = vld [vmem:[#allocation2 + $0x2e8] sm:$0xff]
        %v1037 = vld [vmem:[#allocation2 + $0x2f0] sm:$0xff]
        %v1038 = vld [vmem:[#allocation2 + $0x2f8] sm:$0xff]
        %1039 = vadd.xlane.f32.xlu0 %v1007
        %v1040 = vpop.xlane.xlu0 %1039
        %1041 = vadd.xlane.f32.xlu0 %v1008
        %v1042 = vpop.xlane.xlu0 %1041
        %1043 = vadd.xlane.f32.xlu0 %v1009
        %v1044 = vpop.xlane.xlu0 %1043
        %1045 = vadd.xlane.f32.xlu0 %v1010
        %v1046 = vpop.xlane.xlu0 %1045
        %1047 = vadd.xlane.f32.xlu0 %v1011
        %v1048 = vpop.xlane.xlu0 %1047
        %1049 = vadd.xlane.f32.xlu0 %v1012
        %v1050 = vpop.xlane.xlu0 %1049
        %1051 = vadd.xlane.f32.xlu0 %v1013
        %v1052 = vpop.xlane.xlu0 %1051
        %1053 = vadd.xlane.f32.xlu0 %v1014
        %v1054 = vpop.xlane.xlu0 %1053
        %1055 = vadd.xlane.f32.xlu0 %v1015
        %v1056 = vpop.xlane.xlu0 %1055
        %1057 = vadd.xlane.f32.xlu0 %v1016
        %v1058 = vpop.xlane.xlu0 %1057
        %1059 = vadd.xlane.f32.xlu0 %v1017
        %v1060 = vpop.xlane.xlu0 %1059
        %1061 = vadd.xlane.f32.xlu0 %v1018
        %v1062 = vpop.xlane.xlu0 %1061
        %1063 = vadd.xlane.f32.xlu0 %v1019
        %v1064 = vpop.xlane.xlu0 %1063
        %1065 = vadd.xlane.f32.xlu0 %v1020
        %v1066 = vpop.xlane.xlu0 %1065
        %1067 = vadd.xlane.f32.xlu0 %v1021
        %v1068 = vpop.xlane.xlu0 %1067
        %1069 = vadd.xlane.f32.xlu0 %v1022
        %v1070 = vpop.xlane.xlu0 %1069
        %1071 = vadd.xlane.f32.xlu0 %v1023
        %v1072 = vpop.xlane.xlu0 %1071
        %1073 = vadd.xlane.f32.xlu0 %v1024
        %v1074 = vpop.xlane.xlu0 %1073
        %1075 = vadd.xlane.f32.xlu0 %v1025
        %v1076 = vpop.xlane.xlu0 %1075
        %1077 = vadd.xlane.f32.xlu0 %v1026
        %v1078 = vpop.xlane.xlu0 %1077
        %1079 = vadd.xlane.f32.xlu0 %v1027
        %v1080 = vpop.xlane.xlu0 %1079
        %1081 = vadd.xlane.f32.xlu0 %v1028
        %v1082 = vpop.xlane.xlu0 %1081
        %1083 = vadd.xlane.f32.xlu0 %v1029
        %v1084 = vpop.xlane.xlu0 %1083
        %1085 = vadd.xlane.f32.xlu0 %v1030
        %v1086 = vpop.xlane.xlu0 %1085
        %1087 = vadd.xlane.f32.xlu0 %v1031
        %v1088 = vpop.xlane.xlu0 %1087
        %1089 = vadd.xlane.f32.xlu0 %v1032
        %v1090 = vpop.xlane.xlu0 %1089
        %1091 = vadd.xlane.f32.xlu0 %v1033
        %v1092 = vpop.xlane.xlu0 %1091
        %1093 = vadd.xlane.f32.xlu0 %v1034
        %v1094 = vpop.xlane.xlu0 %1093
        %1095 = vadd.xlane.f32.xlu0 %v1035
        %v1096 = vpop.xlane.xlu0 %1095
        %1097 = vadd.xlane.f32.xlu0 %v1036
        %v1098 = vpop.xlane.xlu0 %1097
        %1099 = vadd.xlane.f32.xlu0 %v1037
        %v1100 = vpop.xlane.xlu0 %1099
        %1101 = vadd.xlane.f32.xlu0 %v1038
        %v1102 = vpop.xlane.xlu0 %1101
        %v1103 = vsub.f32 0.0, %v1040
        %v1104 = vsub.f32 0.0, %v1042
        %v1105 = vsub.f32 0.0, %v1044
        %v1106 = vsub.f32 0.0, %v1046
        %v1107 = vsub.f32 0.0, %v1048
        %v1108 = vsub.f32 0.0, %v1050
        %v1109 = vsub.f32 0.0, %v1052
        %v1110 = vsub.f32 0.0, %v1054
        %v1111 = vsub.f32 0.0, %v1056
        %v1112 = vsub.f32 0.0, %v1058
        %v1113 = vsub.f32 0.0, %v1060
        %v1114 = vsub.f32 0.0, %v1062
        %v1115 = vsub.f32 0.0, %v1064
        %v1116 = vsub.f32 0.0, %v1066
        %v1117 = vsub.f32 0.0, %v1068
        %v1118 = vsub.f32 0.0, %v1070
        %v1119 = vsub.f32 0.0, %v1072
        %v1120 = vsub.f32 0.0, %v1074
        %v1121 = vsub.f32 0.0, %v1076
        %v1122 = vsub.f32 0.0, %v1078
        %v1123 = vsub.f32 0.0, %v1080
        %v1124 = vsub.f32 0.0, %v1082
        %v1125 = vsub.f32 0.0, %v1084
        %v1126 = vsub.f32 0.0, %v1086
        %v1127 = vsub.f32 0.0, %v1088
        %v1128 = vsub.f32 0.0, %v1090
        %v1129 = vsub.f32 0.0, %v1092
        %v1130 = vsub.f32 0.0, %v1094
        %v1131 = vsub.f32 0.0, %v1096
        %v1132 = vsub.f32 0.0, %v1098
        %v1133 = vsub.f32 0.0, %v1100
        %v1134 = vsub.f32 0.0, %v1102
        %vm1135 = vcmask 23568
        %1136 = vst.msk [vmem:[%s213] sm:$0xff] %vm1135, %v1103
        %1137 = vst.msk [vmem:[%s213 + $0x8] sm:$0xff] %vm1135, %v1104
        %1138 = vst.msk [vmem:[%s213 + $0x10] sm:$0xff] %vm1135, %v1105
        %1139 = vst.msk [vmem:[%s213 + $0x18] sm:$0xff] %vm1135, %v1106
        %1140 = vst.msk [vmem:[%s213 + $0x20] sm:$0xff] %vm1135, %v1107
        %1141 = vst.msk [vmem:[%s213 + $0x28] sm:$0xff] %vm1135, %v1108
        %1142 = vst.msk [vmem:[%s213 + $0x30] sm:$0xff] %vm1135, %v1109
        %1143 = vst.msk [vmem:[%s213 + $0x38] sm:$0xff] %vm1135, %v1110
        %1144 = vst.msk [vmem:[%s213 + $0x40] sm:$0xff] %vm1135, %v1111
        %1145 = vst.msk [vmem:[%s213 + $0x48] sm:$0xff] %vm1135, %v1112
        %1146 = vst.msk [vmem:[%s213 + $0x50] sm:$0xff] %vm1135, %v1113
        %1147 = vst.msk [vmem:[%s213 + $0x58] sm:$0xff] %vm1135, %v1114
        %1148 = vst.msk [vmem:[%s213 + $0x60] sm:$0xff] %vm1135, %v1115
        %1149 = vst.msk [vmem:[%s213 + $0x68] sm:$0xff] %vm1135, %v1116
        %1150 = vst.msk [vmem:[%s213 + $0x70] sm:$0xff] %vm1135, %v1117
        %1151 = vst.msk [vmem:[%s213 + $0x78] sm:$0xff] %vm1135, %v1118
        %1152 = vst.msk [vmem:[%s213 + $0x80] sm:$0xff] %vm1135, %v1119
        %1153 = vst.msk [vmem:[%s213 + $0x88] sm:$0xff] %vm1135, %v1120
        %1154 = vst.msk [vmem:[%s213 + $0x90] sm:$0xff] %vm1135, %v1121
        %1155 = vst.msk [vmem:[%s213 + $0x98] sm:$0xff] %vm1135, %v1122
        %1156 = vst.msk [vmem:[%s213 + $0xa0] sm:$0xff] %vm1135, %v1123
        %1157 = vst.msk [vmem:[%s213 + $0xa8] sm:$0xff] %vm1135, %v1124
        %1158 = vst.msk [vmem:[%s213 + $0xb0] sm:$0xff] %vm1135, %v1125
        %1159 = vst.msk [vmem:[%s213 + $0xb8] sm:$0xff] %vm1135, %v1126
        %1160 = vst.msk [vmem:[%s213 + $0xc0] sm:$0xff] %vm1135, %v1127
        %1161 = vst.msk [vmem:[%s213 + $0xc8] sm:$0xff] %vm1135, %v1128
        %1162 = vst.msk [vmem:[%s213 + $0xd0] sm:$0xff] %vm1135, %v1129
        %1163 = vst.msk [vmem:[%s213 + $0xd8] sm:$0xff] %vm1135, %v1130
        %1164 = vst.msk [vmem:[%s213 + $0xe0] sm:$0xff] %vm1135, %v1131
        %1165 = vst.msk [vmem:[%s213 + $0xe8] sm:$0xff] %vm1135, %v1132
        %1166 = vst.msk [vmem:[%s213 + $0xf0] sm:$0xff] %vm1135, %v1133
        %1167 = vst.msk [vmem:[%s213 + $0xf8] sm:$0xff] %vm1135, %v1134
        %v1168 = vld [vmem:[#allocation2 + $0x300] sm:$0xff]
        %v1169 = vld [vmem:[#allocation2 + $0x308] sm:$0xff]
        %v1170 = vld [vmem:[#allocation2 + $0x310] sm:$0xff]
        %v1171 = vld [vmem:[#allocation2 + $0x318] sm:$0xff]
        %v1172 = vld [vmem:[#allocation2 + $0x320] sm:$0xff]
        %v1173 = vld [vmem:[#allocation2 + $0x328] sm:$0xff]
        %v1174 = vld [vmem:[#allocation2 + $0x330] sm:$0xff]
        %v1175 = vld [vmem:[#allocation2 + $0x338] sm:$0xff]
        %v1176 = vld [vmem:[#allocation2 + $0x340] sm:$0xff]
        %v1177 = vld [vmem:[#allocation2 + $0x348] sm:$0xff]
        %v1178 = vld [vmem:[#allocation2 + $0x350] sm:$0xff]
        %v1179 = vld [vmem:[#allocation2 + $0x358] sm:$0xff]
        %v1180 = vld [vmem:[#allocation2 + $0x360] sm:$0xff]
        %v1181 = vld [vmem:[#allocation2 + $0x368] sm:$0xff]
        %v1182 = vld [vmem:[#allocation2 + $0x370] sm:$0xff]
        %v1183 = vld [vmem:[#allocation2 + $0x378] sm:$0xff]
        %v1184 = vld [vmem:[#allocation2 + $0x380] sm:$0xff]
        %v1185 = vld [vmem:[#allocation2 + $0x388] sm:$0xff]
        %v1186 = vld [vmem:[#allocation2 + $0x390] sm:$0xff]
        %v1187 = vld [vmem:[#allocation2 + $0x398] sm:$0xff]
        %v1188 = vld [vmem:[#allocation2 + $0x3a0] sm:$0xff]
        %v1189 = vld [vmem:[#allocation2 + $0x3a8] sm:$0xff]
        %v1190 = vld [vmem:[#allocation2 + $0x3b0] sm:$0xff]
        %v1191 = vld [vmem:[#allocation2 + $0x3b8] sm:$0xff]
        %v1192 = vld [vmem:[#allocation2 + $0x3c0] sm:$0xff]
        %v1193 = vld [vmem:[#allocation2 + $0x3c8] sm:$0xff]
        %v1194 = vld [vmem:[#allocation2 + $0x3d0] sm:$0xff]
        %v1195 = vld [vmem:[#allocation2 + $0x3d8] sm:$0xff]
        %v1196 = vld [vmem:[#allocation2 + $0x3e0] sm:$0xff]
        %v1197 = vld [vmem:[#allocation2 + $0x3e8] sm:$0xff]
        %v1198 = vld [vmem:[#allocation2 + $0x3f0] sm:$0xff]
        %v1199 = vld [vmem:[#allocation2 + $0x3f8] sm:$0xff]
        %1200 = vadd.xlane.f32.xlu0 %v1168
        %v1201 = vpop.xlane.xlu0 %1200
        %1202 = vadd.xlane.f32.xlu0 %v1169
        %v1203 = vpop.xlane.xlu0 %1202
        %1204 = vadd.xlane.f32.xlu0 %v1170
        %v1205 = vpop.xlane.xlu0 %1204
        %1206 = vadd.xlane.f32.xlu0 %v1171
        %v1207 = vpop.xlane.xlu0 %1206
        %1208 = vadd.xlane.f32.xlu0 %v1172
        %v1209 = vpop.xlane.xlu0 %1208
        %1210 = vadd.xlane.f32.xlu0 %v1173
        %v1211 = vpop.xlane.xlu0 %1210
        %1212 = vadd.xlane.f32.xlu0 %v1174
        %v1213 = vpop.xlane.xlu0 %1212
        %1214 = vadd.xlane.f32.xlu0 %v1175
        %v1215 = vpop.xlane.xlu0 %1214
        %1216 = vadd.xlane.f32.xlu0 %v1176
        %v1217 = vpop.xlane.xlu0 %1216
        %1218 = vadd.xlane.f32.xlu0 %v1177
        %v1219 = vpop.xlane.xlu0 %1218
        %1220 = vadd.xlane.f32.xlu0 %v1178
        %v1221 = vpop.xlane.xlu0 %1220
        %1222 = vadd.xlane.f32.xlu0 %v1179
        %v1223 = vpop.xlane.xlu0 %1222
        %1224 = vadd.xlane.f32.xlu0 %v1180
        %v1225 = vpop.xlane.xlu0 %1224
        %1226 = vadd.xlane.f32.xlu0 %v1181
        %v1227 = vpop.xlane.xlu0 %1226
        %1228 = vadd.xlane.f32.xlu0 %v1182
        %v1229 = vpop.xlane.xlu0 %1228
        %1230 = vadd.xlane.f32.xlu0 %v1183
        %v1231 = vpop.xlane.xlu0 %1230
        %1232 = vadd.xlane.f32.xlu0 %v1184
        %v1233 = vpop.xlane.xlu0 %1232
        %1234 = vadd.xlane.f32.xlu0 %v1185
        %v1235 = vpop.xlane.xlu0 %1234
        %1236 = vadd.xlane.f32.xlu0 %v1186
        %v1237 = vpop.xlane.xlu0 %1236
        %1238 = vadd.xlane.f32.xlu0 %v1187
        %v1239 = vpop.xlane.xlu0 %1238
        %1240 = vadd.xlane.f32.xlu0 %v1188
        %v1241 = vpop.xlane.xlu0 %1240
        %1242 = vadd.xlane.f32.xlu0 %v1189
        %v1243 = vpop.xlane.xlu0 %1242
        %1244 = vadd.xlane.f32.xlu0 %v1190
        %v1245 = vpop.xlane.xlu0 %1244
        %1246 = vadd.xlane.f32.xlu0 %v1191
        %v1247 = vpop.xlane.xlu0 %1246
        %1248 = vadd.xlane.f32.xlu0 %v1192
        %v1249 = vpop.xlane.xlu0 %1248
        %1250 = vadd.xlane.f32.xlu0 %v1193
        %v1251 = vpop.xlane.xlu0 %1250
        %1252 = vadd.xlane.f32.xlu0 %v1194
        %v1253 = vpop.xlane.xlu0 %1252
        %1254 = vadd.xlane.f32.xlu0 %v1195
        %v1255 = vpop.xlane.xlu0 %1254
        %1256 = vadd.xlane.f32.xlu0 %v1196
        %v1257 = vpop.xlane.xlu0 %1256
        %1258 = vadd.xlane.f32.xlu0 %v1197
        %v1259 = vpop.xlane.xlu0 %1258
        %1260 = vadd.xlane.f32.xlu0 %v1198
        %v1261 = vpop.xlane.xlu0 %1260
        %1262 = vadd.xlane.f32.xlu0 %v1199
        %v1263 = vpop.xlane.xlu0 %1262
        %v1264 = vsub.f32 0.0, %v1201
        %v1265 = vsub.f32 0.0, %v1203
        %v1266 = vsub.f32 0.0, %v1205
        %v1267 = vsub.f32 0.0, %v1207
        %v1268 = vsub.f32 0.0, %v1209
        %v1269 = vsub.f32 0.0, %v1211
        %v1270 = vsub.f32 0.0, %v1213
        %v1271 = vsub.f32 0.0, %v1215
        %v1272 = vsub.f32 0.0, %v1217
        %v1273 = vsub.f32 0.0, %v1219
        %v1274 = vsub.f32 0.0, %v1221
        %v1275 = vsub.f32 0.0, %v1223
        %v1276 = vsub.f32 0.0, %v1225
        %v1277 = vsub.f32 0.0, %v1227
        %v1278 = vsub.f32 0.0, %v1229
        %v1279 = vsub.f32 0.0, %v1231
        %v1280 = vsub.f32 0.0, %v1233
        %v1281 = vsub.f32 0.0, %v1235
        %v1282 = vsub.f32 0.0, %v1237
        %v1283 = vsub.f32 0.0, %v1239
        %v1284 = vsub.f32 0.0, %v1241
        %v1285 = vsub.f32 0.0, %v1243
        %v1286 = vsub.f32 0.0, %v1245
        %v1287 = vsub.f32 0.0, %v1247
        %v1288 = vsub.f32 0.0, %v1249
        %v1289 = vsub.f32 0.0, %v1251
        %v1290 = vsub.f32 0.0, %v1253
        %v1291 = vsub.f32 0.0, %v1255
        %v1292 = vsub.f32 0.0, %v1257
        %v1293 = vsub.f32 0.0, %v1259
        %v1294 = vsub.f32 0.0, %v1261
        %v1295 = vsub.f32 0.0, %v1263
        %vm1296 = vcmask 31768
        %1297 = vst.msk [vmem:[%s213] sm:$0xff] %vm1296, %v1264
        %1298 = vst.msk [vmem:[%s213 + $0x8] sm:$0xff] %vm1296, %v1265
        %1299 = vst.msk [vmem:[%s213 + $0x10] sm:$0xff] %vm1296, %v1266
        %1300 = vst.msk [vmem:[%s213 + $0x18] sm:$0xff] %vm1296, %v1267
        %1301 = vst.msk [vmem:[%s213 + $0x20] sm:$0xff] %vm1296, %v1268
        %1302 = vst.msk [vmem:[%s213 + $0x28] sm:$0xff] %vm1296, %v1269
        %1303 = vst.msk [vmem:[%s213 + $0x30] sm:$0xff] %vm1296, %v1270
        %1304 = vst.msk [vmem:[%s213 + $0x38] sm:$0xff] %vm1296, %v1271
        %1305 = vst.msk [vmem:[%s213 + $0x40] sm:$0xff] %vm1296, %v1272
        %1306 = vst.msk [vmem:[%s213 + $0x48] sm:$0xff] %vm1296, %v1273
        %1307 = vst.msk [vmem:[%s213 + $0x50] sm:$0xff] %vm1296, %v1274
        %1308 = vst.msk [vmem:[%s213 + $0x58] sm:$0xff] %vm1296, %v1275
        %1309 = vst.msk [vmem:[%s213 + $0x60] sm:$0xff] %vm1296, %v1276
        %1310 = vst.msk [vmem:[%s213 + $0x68] sm:$0xff] %vm1296, %v1277
        %1311 = vst.msk [vmem:[%s213 + $0x70] sm:$0xff] %vm1296, %v1278
        %1312 = vst.msk [vmem:[%s213 + $0x78] sm:$0xff] %vm1296, %v1279
        %1313 = vst.msk [vmem:[%s213 + $0x80] sm:$0xff] %vm1296, %v1280
        %1314 = vst.msk [vmem:[%s213 + $0x88] sm:$0xff] %vm1296, %v1281
        %1315 = vst.msk [vmem:[%s213 + $0x90] sm:$0xff] %vm1296, %v1282
        %1316 = vst.msk [vmem:[%s213 + $0x98] sm:$0xff] %vm1296, %v1283
        %1317 = vst.msk [vmem:[%s213 + $0xa0] sm:$0xff] %vm1296, %v1284
        %1318 = vst.msk [vmem:[%s213 + $0xa8] sm:$0xff] %vm1296, %v1285
        %1319 = vst.msk [vmem:[%s213 + $0xb0] sm:$0xff] %vm1296, %v1286
        %1320 = vst.msk [vmem:[%s213 + $0xb8] sm:$0xff] %vm1296, %v1287
        %1321 = vst.msk [vmem:[%s213 + $0xc0] sm:$0xff] %vm1296, %v1288
        %1322 = vst.msk [vmem:[%s213 + $0xc8] sm:$0xff] %vm1296, %v1289
        %1323 = vst.msk [vmem:[%s213 + $0xd0] sm:$0xff] %vm1296, %v1290
        %1324 = vst.msk [vmem:[%s213 + $0xd8] sm:$0xff] %vm1296, %v1291
        %1325 = vst.msk [vmem:[%s213 + $0xe0] sm:$0xff] %vm1296, %v1292
        %1326 = vst.msk [vmem:[%s213 + $0xe8] sm:$0xff] %vm1296, %v1293
        %1327 = vst.msk [vmem:[%s213 + $0xf0] sm:$0xff] %vm1296, %v1294
        %1328 = vst.msk [vmem:[%s213 + $0xf8] sm:$0xff] %vm1296, %v1295
        %v1329 = vld [vmem:[#allocation2 + $0x400] sm:$0xff]
        %v1330 = vld [vmem:[#allocation2 + $0x408] sm:$0xff]
        %v1331 = vld [vmem:[#allocation2 + $0x410] sm:$0xff]
        %v1332 = vld [vmem:[#allocation2 + $0x418] sm:$0xff]
        %v1333 = vld [vmem:[#allocation2 + $0x420] sm:$0xff]
        %v1334 = vld [vmem:[#allocation2 + $0x428] sm:$0xff]
        %v1335 = vld [vmem:[#allocation2 + $0x430] sm:$0xff]
        %v1336 = vld [vmem:[#allocation2 + $0x438] sm:$0xff]
        %v1337 = vld [vmem:[#allocation2 + $0x440] sm:$0xff]
        %v1338 = vld [vmem:[#allocation2 + $0x448] sm:$0xff]
        %v1339 = vld [vmem:[#allocation2 + $0x450] sm:$0xff]
        %v1340 = vld [vmem:[#allocation2 + $0x458] sm:$0xff]
        %v1341 = vld [vmem:[#allocation2 + $0x460] sm:$0xff]
        %v1342 = vld [vmem:[#allocation2 + $0x468] sm:$0xff]
        %v1343 = vld [vmem:[#allocation2 + $0x470] sm:$0xff]
        %v1344 = vld [vmem:[#allocation2 + $0x478] sm:$0xff]
        %v1345 = vld [vmem:[#allocation2 + $0x480] sm:$0xff]
        %v1346 = vld [vmem:[#allocation2 + $0x488] sm:$0xff]
        %v1347 = vld [vmem:[#allocation2 + $0x490] sm:$0xff]
        %v1348 = vld [vmem:[#allocation2 + $0x498] sm:$0xff]
        %v1349 = vld [vmem:[#allocation2 + $0x4a0] sm:$0xff]
        %v1350 = vld [vmem:[#allocation2 + $0x4a8] sm:$0xff]
        %v1351 = vld [vmem:[#allocation2 + $0x4b0] sm:$0xff]
        %v1352 = vld [vmem:[#allocation2 + $0x4b8] sm:$0xff]
        %v1353 = vld [vmem:[#allocation2 + $0x4c0] sm:$0xff]
        %v1354 = vld [vmem:[#allocation2 + $0x4c8] sm:$0xff]
        %v1355 = vld [vmem:[#allocation2 + $0x4d0] sm:$0xff]
        %v1356 = vld [vmem:[#allocation2 + $0x4d8] sm:$0xff]
        %v1357 = vld [vmem:[#allocation2 + $0x4e0] sm:$0xff]
        %v1358 = vld [vmem:[#allocation2 + $0x4e8] sm:$0xff]
        %v1359 = vld [vmem:[#allocation2 + $0x4f0] sm:$0xff]
        %v1360 = vld [vmem:[#allocation2 + $0x4f8] sm:$0xff]
        %1361 = vadd.xlane.f32.xlu0 %v1329
        %v1362 = vpop.xlane.xlu0 %1361
        %1363 = vadd.xlane.f32.xlu0 %v1330
        %v1364 = vpop.xlane.xlu0 %1363
        %1365 = vadd.xlane.f32.xlu0 %v1331
        %v1366 = vpop.xlane.xlu0 %1365
        %1367 = vadd.xlane.f32.xlu0 %v1332
        %v1368 = vpop.xlane.xlu0 %1367
        %1369 = vadd.xlane.f32.xlu0 %v1333
        %v1370 = vpop.xlane.xlu0 %1369
        %1371 = vadd.xlane.f32.xlu0 %v1334
        %v1372 = vpop.xlane.xlu0 %1371
        %1373 = vadd.xlane.f32.xlu0 %v1335
        %v1374 = vpop.xlane.xlu0 %1373
        %1375 = vadd.xlane.f32.xlu0 %v1336
        %v1376 = vpop.xlane.xlu0 %1375
        %1377 = vadd.xlane.f32.xlu0 %v1337
        %v1378 = vpop.xlane.xlu0 %1377
        %1379 = vadd.xlane.f32.xlu0 %v1338
        %v1380 = vpop.xlane.xlu0 %1379
        %1381 = vadd.xlane.f32.xlu0 %v1339
        %v1382 = vpop.xlane.xlu0 %1381
        %1383 = vadd.xlane.f32.xlu0 %v1340
        %v1384 = vpop.xlane.xlu0 %1383
        %1385 = vadd.xlane.f32.xlu0 %v1341
        %v1386 = vpop.xlane.xlu0 %1385
        %1387 = vadd.xlane.f32.xlu0 %v1342
        %v1388 = vpop.xlane.xlu0 %1387
        %1389 = vadd.xlane.f32.xlu0 %v1343
        %v1390 = vpop.xlane.xlu0 %1389
        %1391 = vadd.xlane.f32.xlu0 %v1344
        %v1392 = vpop.xlane.xlu0 %1391
        %1393 = vadd.xlane.f32.xlu0 %v1345
        %v1394 = vpop.xlane.xlu0 %1393
        %1395 = vadd.xlane.f32.xlu0 %v1346
        %v1396 = vpop.xlane.xlu0 %1395
        %1397 = vadd.xlane.f32.xlu0 %v1347
        %v1398 = vpop.xlane.xlu0 %1397
        %1399 = vadd.xlane.f32.xlu0 %v1348
        %v1400 = vpop.xlane.xlu0 %1399
        %1401 = vadd.xlane.f32.xlu0 %v1349
        %v1402 = vpop.xlane.xlu0 %1401
        %1403 = vadd.xlane.f32.xlu0 %v1350
        %v1404 = vpop.xlane.xlu0 %1403
        %1405 = vadd.xlane.f32.xlu0 %v1351
        %v1406 = vpop.xlane.xlu0 %1405
        %1407 = vadd.xlane.f32.xlu0 %v1352
        %v1408 = vpop.xlane.xlu0 %1407
        %1409 = vadd.xlane.f32.xlu0 %v1353
        %v1410 = vpop.xlane.xlu0 %1409
        %1411 = vadd.xlane.f32.xlu0 %v1354
        %v1412 = vpop.xlane.xlu0 %1411
        %1413 = vadd.xlane.f32.xlu0 %v1355
        %v1414 = vpop.xlane.xlu0 %1413
        %1415 = vadd.xlane.f32.xlu0 %v1356
        %v1416 = vpop.xlane.xlu0 %1415
        %1417 = vadd.xlane.f32.xlu0 %v1357
        %v1418 = vpop.xlane.xlu0 %1417
        %1419 = vadd.xlane.f32.xlu0 %v1358
        %v1420 = vpop.xlane.xlu0 %1419
        %1421 = vadd.xlane.f32.xlu0 %v1359
        %v1422 = vpop.xlane.xlu0 %1421
        %1423 = vadd.xlane.f32.xlu0 %v1360
        %v1424 = vpop.xlane.xlu0 %1423
        %v1425 = vsub.f32 0.0, %v1362
        %v1426 = vsub.f32 0.0, %v1364
        %v1427 = vsub.f32 0.0, %v1366
        %v1428 = vsub.f32 0.0, %v1368
        %v1429 = vsub.f32 0.0, %v1370
        %v1430 = vsub.f32 0.0, %v1372
        %v1431 = vsub.f32 0.0, %v1374
        %v1432 = vsub.f32 0.0, %v1376
        %v1433 = vsub.f32 0.0, %v1378
        %v1434 = vsub.f32 0.0, %v1380
        %v1435 = vsub.f32 0.0, %v1382
        %v1436 = vsub.f32 0.0, %v1384
        %v1437 = vsub.f32 0.0, %v1386
        %v1438 = vsub.f32 0.0, %v1388
        %v1439 = vsub.f32 0.0, %v1390
        %v1440 = vsub.f32 0.0, %v1392
        %v1441 = vsub.f32 0.0, %v1394
        %v1442 = vsub.f32 0.0, %v1396
        %v1443 = vsub.f32 0.0, %v1398
        %v1444 = vsub.f32 0.0, %v1400
        %v1445 = vsub.f32 0.0, %v1402
        %v1446 = vsub.f32 0.0, %v1404
        %v1447 = vsub.f32 0.0, %v1406
        %v1448 = vsub.f32 0.0, %v1408
        %v1449 = vsub.f32 0.0, %v1410
        %v1450 = vsub.f32 0.0, %v1412
        %v1451 = vsub.f32 0.0, %v1414
        %v1452 = vsub.f32 0.0, %v1416
        %v1453 = vsub.f32 0.0, %v1418
        %v1454 = vsub.f32 0.0, %v1420
        %v1455 = vsub.f32 0.0, %v1422
        %v1456 = vsub.f32 0.0, %v1424
        %vm1457 = vcmask 39968
        %1458 = vst.msk [vmem:[%s213] sm:$0xff] %vm1457, %v1425
        %1459 = vst.msk [vmem:[%s213 + $0x8] sm:$0xff] %vm1457, %v1426
        %1460 = vst.msk [vmem:[%s213 + $0x10] sm:$0xff] %vm1457, %v1427
        %1461 = vst.msk [vmem:[%s213 + $0x18] sm:$0xff] %vm1457, %v1428
        %1462 = vst.msk [vmem:[%s213 + $0x20] sm:$0xff] %vm1457, %v1429
        %1463 = vst.msk [vmem:[%s213 + $0x28] sm:$0xff] %vm1457, %v1430
        %1464 = vst.msk [vmem:[%s213 + $0x30] sm:$0xff] %vm1457, %v1431
        %1465 = vst.msk [vmem:[%s213 + $0x38] sm:$0xff] %vm1457, %v1432
        %1466 = vst.msk [vmem:[%s213 + $0x40] sm:$0xff] %vm1457, %v1433
        %1467 = vst.msk [vmem:[%s213 + $0x48] sm:$0xff] %vm1457, %v1434
        %1468 = vst.msk [vmem:[%s213 + $0x50] sm:$0xff] %vm1457, %v1435
        %1469 = vst.msk [vmem:[%s213 + $0x58] sm:$0xff] %vm1457, %v1436
        %1470 = vst.msk [vmem:[%s213 + $0x60] sm:$0xff] %vm1457, %v1437
        %1471 = vst.msk [vmem:[%s213 + $0x68] sm:$0xff] %vm1457, %v1438
        %1472 = vst.msk [vmem:[%s213 + $0x70] sm:$0xff] %vm1457, %v1439
        %1473 = vst.msk [vmem:[%s213 + $0x78] sm:$0xff] %vm1457, %v1440
        %1474 = vst.msk [vmem:[%s213 + $0x80] sm:$0xff] %vm1457, %v1441
        %1475 = vst.msk [vmem:[%s213 + $0x88] sm:$0xff] %vm1457, %v1442
        %1476 = vst.msk [vmem:[%s213 + $0x90] sm:$0xff] %vm1457, %v1443
        %1477 = vst.msk [vmem:[%s213 + $0x98] sm:$0xff] %vm1457, %v1444
        %1478 = vst.msk [vmem:[%s213 + $0xa0] sm:$0xff] %vm1457, %v1445
        %1479 = vst.msk [vmem:[%s213 + $0xa8] sm:$0xff] %vm1457, %v1446
        %1480 = vst.msk [vmem:[%s213 + $0xb0] sm:$0xff] %vm1457, %v1447
        %1481 = vst.msk [vmem:[%s213 + $0xb8] sm:$0xff] %vm1457, %v1448
        %1482 = vst.msk [vmem:[%s213 + $0xc0] sm:$0xff] %vm1457, %v1449
        %1483 = vst.msk [vmem:[%s213 + $0xc8] sm:$0xff] %vm1457, %v1450
        %1484 = vst.msk [vmem:[%s213 + $0xd0] sm:$0xff] %vm1457, %v1451
        %1485 = vst.msk [vmem:[%s213 + $0xd8] sm:$0xff] %vm1457, %v1452
        %1486 = vst.msk [vmem:[%s213 + $0xe0] sm:$0xff] %vm1457, %v1453
        %1487 = vst.msk [vmem:[%s213 + $0xe8] sm:$0xff] %vm1457, %v1454
        %1488 = vst.msk [vmem:[%s213 + $0xf0] sm:$0xff] %vm1457, %v1455
        %1489 = vst.msk [vmem:[%s213 + $0xf8] sm:$0xff] %vm1457, %v1456
        %v1490 = vld [vmem:[#allocation2 + $0x500] sm:$0xff]
        %v1491 = vld [vmem:[#allocation2 + $0x508] sm:$0xff]
        %v1492 = vld [vmem:[#allocation2 + $0x510] sm:$0xff]
        %v1493 = vld [vmem:[#allocation2 + $0x518] sm:$0xff]
        %v1494 = vld [vmem:[#allocation2 + $0x520] sm:$0xff]
        %v1495 = vld [vmem:[#allocation2 + $0x528] sm:$0xff]
        %v1496 = vld [vmem:[#allocation2 + $0x530] sm:$0xff]
        %v1497 = vld [vmem:[#allocation2 + $0x538] sm:$0xff]
        %v1498 = vld [vmem:[#allocation2 + $0x540] sm:$0xff]
        %v1499 = vld [vmem:[#allocation2 + $0x548] sm:$0xff]
        %v1500 = vld [vmem:[#allocation2 + $0x550] sm:$0xff]
        %v1501 = vld [vmem:[#allocation2 + $0x558] sm:$0xff]
        %v1502 = vld [vmem:[#allocation2 + $0x560] sm:$0xff]
        %v1503 = vld [vmem:[#allocation2 + $0x568] sm:$0xff]
        %v1504 = vld [vmem:[#allocation2 + $0x570] sm:$0xff]
        %v1505 = vld [vmem:[#allocation2 + $0x578] sm:$0xff]
        %v1506 = vld [vmem:[#allocation2 + $0x580] sm:$0xff]
        %v1507 = vld [vmem:[#allocation2 + $0x588] sm:$0xff]
        %v1508 = vld [vmem:[#allocation2 + $0x590] sm:$0xff]
        %v1509 = vld [vmem:[#allocation2 + $0x598] sm:$0xff]
        %v1510 = vld [vmem:[#allocation2 + $0x5a0] sm:$0xff]
        %v1511 = vld [vmem:[#allocation2 + $0x5a8] sm:$0xff]
        %v1512 = vld [vmem:[#allocation2 + $0x5b0] sm:$0xff]
        %v1513 = vld [vmem:[#allocation2 + $0x5b8] sm:$0xff]
        %v1514 = vld [vmem:[#allocation2 + $0x5c0] sm:$0xff]
        %v1515 = vld [vmem:[#allocation2 + $0x5c8] sm:$0xff]
        %v1516 = vld [vmem:[#allocation2 + $0x5d0] sm:$0xff]
        %v1517 = vld [vmem:[#allocation2 + $0x5d8] sm:$0xff]
        %v1518 = vld [vmem:[#allocation2 + $0x5e0] sm:$0xff]
        %v1519 = vld [vmem:[#allocation2 + $0x5e8] sm:$0xff]
        %v1520 = vld [vmem:[#allocation2 + $0x5f0] sm:$0xff]
        %v1521 = vld [vmem:[#allocation2 + $0x5f8] sm:$0xff]
        %1522 = vadd.xlane.f32.xlu0 %v1490
        %v1523 = vpop.xlane.xlu0 %1522
        %1524 = vadd.xlane.f32.xlu0 %v1491
        %v1525 = vpop.xlane.xlu0 %1524
        %1526 = vadd.xlane.f32.xlu0 %v1492
        %v1527 = vpop.xlane.xlu0 %1526
        %1528 = vadd.xlane.f32.xlu0 %v1493
        %v1529 = vpop.xlane.xlu0 %1528
        %1530 = vadd.xlane.f32.xlu0 %v1494
        %v1531 = vpop.xlane.xlu0 %1530
        %1532 = vadd.xlane.f32.xlu0 %v1495
        %v1533 = vpop.xlane.xlu0 %1532
        %1534 = vadd.xlane.f32.xlu0 %v1496
        %v1535 = vpop.xlane.xlu0 %1534
        %1536 = vadd.xlane.f32.xlu0 %v1497
        %v1537 = vpop.xlane.xlu0 %1536
        %1538 = vadd.xlane.f32.xlu0 %v1498
        %v1539 = vpop.xlane.xlu0 %1538
        %1540 = vadd.xlane.f32.xlu0 %v1499
        %v1541 = vpop.xlane.xlu0 %1540
        %1542 = vadd.xlane.f32.xlu0 %v1500
        %v1543 = vpop.xlane.xlu0 %1542
        %1544 = vadd.xlane.f32.xlu0 %v1501
        %v1545 = vpop.xlane.xlu0 %1544
        %1546 = vadd.xlane.f32.xlu0 %v1502
        %v1547 = vpop.xlane.xlu0 %1546
        %1548 = vadd.xlane.f32.xlu0 %v1503
        %v1549 = vpop.xlane.xlu0 %1548
        %1550 = vadd.xlane.f32.xlu0 %v1504
        %v1551 = vpop.xlane.xlu0 %1550
        %1552 = vadd.xlane.f32.xlu0 %v1505
        %v1553 = vpop.xlane.xlu0 %1552
        %1554 = vadd.xlane.f32.xlu0 %v1506
        %v1555 = vpop.xlane.xlu0 %1554
        %1556 = vadd.xlane.f32.xlu0 %v1507
        %v1557 = vpop.xlane.xlu0 %1556
        %1558 = vadd.xlane.f32.xlu0 %v1508
        %v1559 = vpop.xlane.xlu0 %1558
        %1560 = vadd.xlane.f32.xlu0 %v1509
        %v1561 = vpop.xlane.xlu0 %1560
        %1562 = vadd.xlane.f32.xlu0 %v1510
        %v1563 = vpop.xlane.xlu0 %1562
        %1564 = vadd.xlane.f32.xlu0 %v1511
        %v1565 = vpop.xlane.xlu0 %1564
        %1566 = vadd.xlane.f32.xlu0 %v1512
        %v1567 = vpop.xlane.xlu0 %1566
        %1568 = vadd.xlane.f32.xlu0 %v1513
        %v1569 = vpop.xlane.xlu0 %1568
        %1570 = vadd.xlane.f32.xlu0 %v1514
        %v1571 = vpop.xlane.xlu0 %1570
        %1572 = vadd.xlane.f32.xlu0 %v1515
        %v1573 = vpop.xlane.xlu0 %1572
        %1574 = vadd.xlane.f32.xlu0 %v1516
        %v1575 = vpop.xlane.xlu0 %1574
        %1576 = vadd.xlane.f32.xlu0 %v1517
        %v1577 = vpop.xlane.xlu0 %1576
        %1578 = vadd.xlane.f32.xlu0 %v1518
        %v1579 = vpop.xlane.xlu0 %1578
        %1580 = vadd.xlane.f32.xlu0 %v1519
        %v1581 = vpop.xlane.xlu0 %1580
        %1582 = vadd.xlane.f32.xlu0 %v1520
        %v1583 = vpop.xlane.xlu0 %1582
        %1584 = vadd.xlane.f32.xlu0 %v1521
        %v1585 = vpop.xlane.xlu0 %1584
        %v1586 = vsub.f32 0.0, %v1523
        %v1587 = vsub.f32 0.0, %v1525
        %v1588 = vsub.f32 0.0, %v1527
        %v1589 = vsub.f32 0.0, %v1529
        %v1590 = vsub.f32 0.0, %v1531
        %v1591 = vsub.f32 0.0, %v1533
        %v1592 = vsub.f32 0.0, %v1535
        %v1593 = vsub.f32 0.0, %v1537
        %v1594 = vsub.f32 0.0, %v1539
        %v1595 = vsub.f32 0.0, %v1541
        %v1596 = vsub.f32 0.0, %v1543
        %v1597 = vsub.f32 0.0, %v1545
        %v1598 = vsub.f32 0.0, %v1547
        %v1599 = vsub.f32 0.0, %v1549
        %v1600 = vsub.f32 0.0, %v1551
        %v1601 = vsub.f32 0.0, %v1553
        %v1602 = vsub.f32 0.0, %v1555
        %v1603 = vsub.f32 0.0, %v1557
        %v1604 = vsub.f32 0.0, %v1559
        %v1605 = vsub.f32 0.0, %v1561
        %v1606 = vsub.f32 0.0, %v1563
        %v1607 = vsub.f32 0.0, %v1565
        %v1608 = vsub.f32 0.0, %v1567
        %v1609 = vsub.f32 0.0, %v1569
        %v1610 = vsub.f32 0.0, %v1571
        %v1611 = vsub.f32 0.0, %v1573
        %v1612 = vsub.f32 0.0, %v1575
        %v1613 = vsub.f32 0.0, %v1577
        %v1614 = vsub.f32 0.0, %v1579
        %v1615 = vsub.f32 0.0, %v1581
        %v1616 = vsub.f32 0.0, %v1583
        %v1617 = vsub.f32 0.0, %v1585
        %vm1618 = vcmask 48168
        %1619 = vst.msk [vmem:[%s213] sm:$0xff] %vm1618, %v1586
        %1620 = vst.msk [vmem:[%s213 + $0x8] sm:$0xff] %vm1618, %v1587
        %1621 = vst.msk [vmem:[%s213 + $0x10] sm:$0xff] %vm1618, %v1588
        %1622 = vst.msk [vmem:[%s213 + $0x18] sm:$0xff] %vm1618, %v1589
        %1623 = vst.msk [vmem:[%s213 + $0x20] sm:$0xff] %vm1618, %v1590
        %1624 = vst.msk [vmem:[%s213 + $0x28] sm:$0xff] %vm1618, %v1591
        %1625 = vst.msk [vmem:[%s213 + $0x30] sm:$0xff] %vm1618, %v1592
        %1626 = vst.msk [vmem:[%s213 + $0x38] sm:$0xff] %vm1618, %v1593
        %1627 = vst.msk [vmem:[%s213 + $0x40] sm:$0xff] %vm1618, %v1594
        %1628 = vst.msk [vmem:[%s213 + $0x48] sm:$0xff] %vm1618, %v1595
        %1629 = vst.msk [vmem:[%s213 + $0x50] sm:$0xff] %vm1618, %v1596
        %1630 = vst.msk [vmem:[%s213 + $0x58] sm:$0xff] %vm1618, %v1597
        %1631 = vst.msk [vmem:[%s213 + $0x60] sm:$0xff] %vm1618, %v1598
        %1632 = vst.msk [vmem:[%s213 + $0x68] sm:$0xff] %vm1618, %v1599
        %1633 = vst.msk [vmem:[%s213 + $0x70] sm:$0xff] %vm1618, %v1600
        %1634 = vst.msk [vmem:[%s213 + $0x78] sm:$0xff] %vm1618, %v1601
        %1635 = vst.msk [vmem:[%s213 + $0x80] sm:$0xff] %vm1618, %v1602
        %1636 = vst.msk [vmem:[%s213 + $0x88] sm:$0xff] %vm1618, %v1603
        %1637 = vst.msk [vmem:[%s213 + $0x90] sm:$0xff] %vm1618, %v1604
        %1638 = vst.msk [vmem:[%s213 + $0x98] sm:$0xff] %vm1618, %v1605
        %1639 = vst.msk [vmem:[%s213 + $0xa0] sm:$0xff] %vm1618, %v1606
        %1640 = vst.msk [vmem:[%s213 + $0xa8] sm:$0xff] %vm1618, %v1607
        %1641 = vst.msk [vmem:[%s213 + $0xb0] sm:$0xff] %vm1618, %v1608
        %1642 = vst.msk [vmem:[%s213 + $0xb8] sm:$0xff] %vm1618, %v1609
        %1643 = vst.msk [vmem:[%s213 + $0xc0] sm:$0xff] %vm1618, %v1610
        %1644 = vst.msk [vmem:[%s213 + $0xc8] sm:$0xff] %vm1618, %v1611
        %1645 = vst.msk [vmem:[%s213 + $0xd0] sm:$0xff] %vm1618, %v1612
        %1646 = vst.msk [vmem:[%s213 + $0xd8] sm:$0xff] %vm1618, %v1613
        %1647 = vst.msk [vmem:[%s213 + $0xe0] sm:$0xff] %vm1618, %v1614
        %1648 = vst.msk [vmem:[%s213 + $0xe8] sm:$0xff] %vm1618, %v1615
        %1649 = vst.msk [vmem:[%s213 + $0xf0] sm:$0xff] %vm1618, %v1616
        %1650 = vst.msk [vmem:[%s213 + $0xf8] sm:$0xff] %vm1618, %v1617
        %v1651 = vld [vmem:[#allocation2 + $0x600] sm:$0xff]
        %v1652 = vld [vmem:[#allocation2 + $0x608] sm:$0xff]
        %v1653 = vld [vmem:[#allocation2 + $0x610] sm:$0xff]
        %v1654 = vld [vmem:[#allocation2 + $0x618] sm:$0xff]
        %v1655 = vld [vmem:[#allocation2 + $0x620] sm:$0xff]
        %v1656 = vld [vmem:[#allocation2 + $0x628] sm:$0xff]
        %v1657 = vld [vmem:[#allocation2 + $0x630] sm:$0xff]
        %v1658 = vld [vmem:[#allocation2 + $0x638] sm:$0xff]
        %v1659 = vld [vmem:[#allocation2 + $0x640] sm:$0xff]
        %v1660 = vld [vmem:[#allocation2 + $0x648] sm:$0xff]
        %v1661 = vld [vmem:[#allocation2 + $0x650] sm:$0xff]
        %v1662 = vld [vmem:[#allocation2 + $0x658] sm:$0xff]
        %v1663 = vld [vmem:[#allocation2 + $0x660] sm:$0xff]
        %v1664 = vld [vmem:[#allocation2 + $0x668] sm:$0xff]
        %v1665 = vld [vmem:[#allocation2 + $0x670] sm:$0xff]
        %v1666 = vld [vmem:[#allocation2 + $0x678] sm:$0xff]
        %v1667 = vld [vmem:[#allocation2 + $0x680] sm:$0xff]
        %v1668 = vld [vmem:[#allocation2 + $0x688] sm:$0xff]
        %v1669 = vld [vmem:[#allocation2 + $0x690] sm:$0xff]
        %v1670 = vld [vmem:[#allocation2 + $0x698] sm:$0xff]
        %v1671 = vld [vmem:[#allocation2 + $0x6a0] sm:$0xff]
        %v1672 = vld [vmem:[#allocation2 + $0x6a8] sm:$0xff]
        %v1673 = vld [vmem:[#allocation2 + $0x6b0] sm:$0xff]
        %v1674 = vld [vmem:[#allocation2 + $0x6b8] sm:$0xff]
        %v1675 = vld [vmem:[#allocation2 + $0x6c0] sm:$0xff]
        %v1676 = vld [vmem:[#allocation2 + $0x6c8] sm:$0xff]
        %v1677 = vld [vmem:[#allocation2 + $0x6d0] sm:$0xff]
        %v1678 = vld [vmem:[#allocation2 + $0x6d8] sm:$0xff]
        %v1679 = vld [vmem:[#allocation2 + $0x6e0] sm:$0xff]
        %v1680 = vld [vmem:[#allocation2 + $0x6e8] sm:$0xff]
        %v1681 = vld [vmem:[#allocation2 + $0x6f0] sm:$0xff]
        %v1682 = vld [vmem:[#allocation2 + $0x6f8] sm:$0xff]
        %1683 = vadd.xlane.f32.xlu0 %v1651
        %v1684 = vpop.xlane.xlu0 %1683
        %1685 = vadd.xlane.f32.xlu0 %v1652
        %v1686 = vpop.xlane.xlu0 %1685
        %1687 = vadd.xlane.f32.xlu0 %v1653
        %v1688 = vpop.xlane.xlu0 %1687
        %1689 = vadd.xlane.f32.xlu0 %v1654
        %v1690 = vpop.xlane.xlu0 %1689
        %1691 = vadd.xlane.f32.xlu0 %v1655
        %v1692 = vpop.xlane.xlu0 %1691
        %1693 = vadd.xlane.f32.xlu0 %v1656
        %v1694 = vpop.xlane.xlu0 %1693
        %1695 = vadd.xlane.f32.xlu0 %v1657
        %v1696 = vpop.xlane.xlu0 %1695
        %1697 = vadd.xlane.f32.xlu0 %v1658
        %v1698 = vpop.xlane.xlu0 %1697
        %1699 = vadd.xlane.f32.xlu0 %v1659
        %v1700 = vpop.xlane.xlu0 %1699
        %1701 = vadd.xlane.f32.xlu0 %v1660
        %v1702 = vpop.xlane.xlu0 %1701
        %1703 = vadd.xlane.f32.xlu0 %v1661
        %v1704 = vpop.xlane.xlu0 %1703
        %1705 = vadd.xlane.f32.xlu0 %v1662
        %v1706 = vpop.xlane.xlu0 %1705
        %1707 = vadd.xlane.f32.xlu0 %v1663
        %v1708 = vpop.xlane.xlu0 %1707
        %1709 = vadd.xlane.f32.xlu0 %v1664
        %v1710 = vpop.xlane.xlu0 %1709
        %1711 = vadd.xlane.f32.xlu0 %v1665
        %v1712 = vpop.xlane.xlu0 %1711
        %1713 = vadd.xlane.f32.xlu0 %v1666
        %v1714 = vpop.xlane.xlu0 %1713
        %1715 = vadd.xlane.f32.xlu0 %v1667
        %v1716 = vpop.xlane.xlu0 %1715
        %1717 = vadd.xlane.f32.xlu0 %v1668
        %v1718 = vpop.xlane.xlu0 %1717
        %1719 = vadd.xlane.f32.xlu0 %v1669
        %v1720 = vpop.xlane.xlu0 %1719
        %1721 = vadd.xlane.f32.xlu0 %v1670
        %v1722 = vpop.xlane.xlu0 %1721
        %1723 = vadd.xlane.f32.xlu0 %v1671
        %v1724 = vpop.xlane.xlu0 %1723
        %1725 = vadd.xlane.f32.xlu0 %v1672
        %v1726 = vpop.xlane.xlu0 %1725
        %1727 = vadd.xlane.f32.xlu0 %v1673
        %v1728 = vpop.xlane.xlu0 %1727
        %1729 = vadd.xlane.f32.xlu0 %v1674
        %v1730 = vpop.xlane.xlu0 %1729
        %1731 = vadd.xlane.f32.xlu0 %v1675
        %v1732 = vpop.xlane.xlu0 %1731
        %1733 = vadd.xlane.f32.xlu0 %v1676
        %v1734 = vpop.xlane.xlu0 %1733
        %1735 = vadd.xlane.f32.xlu0 %v1677
        %v1736 = vpop.xlane.xlu0 %1735
        %1737 = vadd.xlane.f32.xlu0 %v1678
        %v1738 = vpop.xlane.xlu0 %1737
        %1739 = vadd.xlane.f32.xlu0 %v1679
        %v1740 = vpop.xlane.xlu0 %1739
        %1741 = vadd.xlane.f32.xlu0 %v1680
        %v1742 = vpop.xlane.xlu0 %1741
        %1743 = vadd.xlane.f32.xlu0 %v1681
        %v1744 = vpop.xlane.xlu0 %1743
        %1745 = vadd.xlane.f32.xlu0 %v1682
        %v1746 = vpop.xlane.xlu0 %1745
        %v1747 = vsub.f32 0.0, %v1684
        %v1748 = vsub.f32 0.0, %v1686
        %v1749 = vsub.f32 0.0, %v1688
        %v1750 = vsub.f32 0.0, %v1690
        %v1751 = vsub.f32 0.0, %v1692
        %v1752 = vsub.f32 0.0, %v1694
        %v1753 = vsub.f32 0.0, %v1696
        %v1754 = vsub.f32 0.0, %v1698
        %v1755 = vsub.f32 0.0, %v1700
        %v1756 = vsub.f32 0.0, %v1702
        %v1757 = vsub.f32 0.0, %v1704
        %v1758 = vsub.f32 0.0, %v1706
        %v1759 = vsub.f32 0.0, %v1708
        %v1760 = vsub.f32 0.0, %v1710
        %v1761 = vsub.f32 0.0, %v1712
        %v1762 = vsub.f32 0.0, %v1714
        %v1763 = vsub.f32 0.0, %v1716
        %v1764 = vsub.f32 0.0, %v1718
        %v1765 = vsub.f32 0.0, %v1720
        %v1766 = vsub.f32 0.0, %v1722
        %v1767 = vsub.f32 0.0, %v1724
        %v1768 = vsub.f32 0.0, %v1726
        %v1769 = vsub.f32 0.0, %v1728
        %v1770 = vsub.f32 0.0, %v1730
        %v1771 = vsub.f32 0.0, %v1732
        %v1772 = vsub.f32 0.0, %v1734
        %v1773 = vsub.f32 0.0, %v1736
        %v1774 = vsub.f32 0.0, %v1738
        %v1775 = vsub.f32 0.0, %v1740
        %v1776 = vsub.f32 0.0, %v1742
        %v1777 = vsub.f32 0.0, %v1744
        %v1778 = vsub.f32 0.0, %v1746
        %vm1779 = vcmask 56368
        %1780 = vst.msk [vmem:[%s213] sm:$0xff] %vm1779, %v1747
        %1781 = vst.msk [vmem:[%s213 + $0x8] sm:$0xff] %vm1779, %v1748
        %1782 = vst.msk [vmem:[%s213 + $0x10] sm:$0xff] %vm1779, %v1749
        %1783 = vst.msk [vmem:[%s213 + $0x18] sm:$0xff] %vm1779, %v1750
        %1784 = vst.msk [vmem:[%s213 + $0x20] sm:$0xff] %vm1779, %v1751
        %1785 = vst.msk [vmem:[%s213 + $0x28] sm:$0xff] %vm1779, %v1752
        %1786 = vst.msk [vmem:[%s213 + $0x30] sm:$0xff] %vm1779, %v1753
        %1787 = vst.msk [vmem:[%s213 + $0x38] sm:$0xff] %vm1779, %v1754
        %1788 = vst.msk [vmem:[%s213 + $0x40] sm:$0xff] %vm1779, %v1755
        %1789 = vst.msk [vmem:[%s213 + $0x48] sm:$0xff] %vm1779, %v1756
        %1790 = vst.msk [vmem:[%s213 + $0x50] sm:$0xff] %vm1779, %v1757
        %1791 = vst.msk [vmem:[%s213 + $0x58] sm:$0xff] %vm1779, %v1758
        %1792 = vst.msk [vmem:[%s213 + $0x60] sm:$0xff] %vm1779, %v1759
        %1793 = vst.msk [vmem:[%s213 + $0x68] sm:$0xff] %vm1779, %v1760
        %1794 = vst.msk [vmem:[%s213 + $0x70] sm:$0xff] %vm1779, %v1761
        %1795 = vst.msk [vmem:[%s213 + $0x78] sm:$0xff] %vm1779, %v1762
        %1796 = vst.msk [vmem:[%s213 + $0x80] sm:$0xff] %vm1779, %v1763
        %1797 = vst.msk [vmem:[%s213 + $0x88] sm:$0xff] %vm1779, %v1764
        %1798 = vst.msk [vmem:[%s213 + $0x90] sm:$0xff] %vm1779, %v1765
        %1799 = vst.msk [vmem:[%s213 + $0x98] sm:$0xff] %vm1779, %v1766
        %1800 = vst.msk [vmem:[%s213 + $0xa0] sm:$0xff] %vm1779, %v1767
        %1801 = vst.msk [vmem:[%s213 + $0xa8] sm:$0xff] %vm1779, %v1768
        %1802 = vst.msk [vmem:[%s213 + $0xb0] sm:$0xff] %vm1779, %v1769
        %1803 = vst.msk [vmem:[%s213 + $0xb8] sm:$0xff] %vm1779, %v1770
        %1804 = vst.msk [vmem:[%s213 + $0xc0] sm:$0xff] %vm1779, %v1771
        %1805 = vst.msk [vmem:[%s213 + $0xc8] sm:$0xff] %vm1779, %v1772
        %1806 = vst.msk [vmem:[%s213 + $0xd0] sm:$0xff] %vm1779, %v1773
        %1807 = vst.msk [vmem:[%s213 + $0xd8] sm:$0xff] %vm1779, %v1774
        %1808 = vst.msk [vmem:[%s213 + $0xe0] sm:$0xff] %vm1779, %v1775
        %1809 = vst.msk [vmem:[%s213 + $0xe8] sm:$0xff] %vm1779, %v1776
        %1810 = vst.msk [vmem:[%s213 + $0xf0] sm:$0xff] %vm1779, %v1777
        %1811 = vst.msk [vmem:[%s213 + $0xf8] sm:$0xff] %vm1779, %v1778
        %v1812 = vld [vmem:[#allocation2 + $0x700] sm:$0xff]
        %v1813 = vld [vmem:[#allocation2 + $0x708] sm:$0xff]
        %v1814 = vld [vmem:[#allocation2 + $0x710] sm:$0xff]
        %v1815 = vld [vmem:[#allocation2 + $0x718] sm:$0xff]
        %v1816 = vld [vmem:[#allocation2 + $0x720] sm:$0xff]
        %v1817 = vld [vmem:[#allocation2 + $0x728] sm:$0xff]
        %v1818 = vld [vmem:[#allocation2 + $0x730] sm:$0xff]
        %v1819 = vld [vmem:[#allocation2 + $0x738] sm:$0xff]
        %v1820 = vld [vmem:[#allocation2 + $0x740] sm:$0xff]
        %v1821 = vld [vmem:[#allocation2 + $0x748] sm:$0xff]
        %v1822 = vld [vmem:[#allocation2 + $0x750] sm:$0xff]
        %v1823 = vld [vmem:[#allocation2 + $0x758] sm:$0xff]
        %v1824 = vld [vmem:[#allocation2 + $0x760] sm:$0xff]
        %v1825 = vld [vmem:[#allocation2 + $0x768] sm:$0xff]
        %v1826 = vld [vmem:[#allocation2 + $0x770] sm:$0xff]
        %v1827 = vld [vmem:[#allocation2 + $0x778] sm:$0xff]
        %v1828 = vld [vmem:[#allocation2 + $0x780] sm:$0xff]
        %v1829 = vld [vmem:[#allocation2 + $0x788] sm:$0xff]
        %v1830 = vld [vmem:[#allocation2 + $0x790] sm:$0xff]
        %v1831 = vld [vmem:[#allocation2 + $0x798] sm:$0xff]
        %v1832 = vld [vmem:[#allocation2 + $0x7a0] sm:$0xff]
        %v1833 = vld [vmem:[#allocation2 + $0x7a8] sm:$0xff]
        %v1834 = vld [vmem:[#allocation2 + $0x7b0] sm:$0xff]
        %v1835 = vld [vmem:[#allocation2 + $0x7b8] sm:$0xff]
        %v1836 = vld [vmem:[#allocation2 + $0x7c0] sm:$0xff]
        %v1837 = vld [vmem:[#allocation2 + $0x7c8] sm:$0xff]
        %v1838 = vld [vmem:[#allocation2 + $0x7d0] sm:$0xff]
        %v1839 = vld [vmem:[#allocation2 + $0x7d8] sm:$0xff]
        %v1840 = vld [vmem:[#allocation2 + $0x7e0] sm:$0xff]
        %v1841 = vld [vmem:[#allocation2 + $0x7e8] sm:$0xff]
        %v1842 = vld [vmem:[#allocation2 + $0x7f0] sm:$0xff]
        %v1843 = vld [vmem:[#allocation2 + $0x7f8] sm:$0xff]
        %1844 = vadd.xlane.f32.xlu0 %v1812
        %v1845 = vpop.xlane.xlu0 %1844
        %1846 = vadd.xlane.f32.xlu0 %v1813
        %v1847 = vpop.xlane.xlu0 %1846
        %1848 = vadd.xlane.f32.xlu0 %v1814
        %v1849 = vpop.xlane.xlu0 %1848
        %1850 = vadd.xlane.f32.xlu0 %v1815
        %v1851 = vpop.xlane.xlu0 %1850
        %1852 = vadd.xlane.f32.xlu0 %v1816
        %v1853 = vpop.xlane.xlu0 %1852
        %1854 = vadd.xlane.f32.xlu0 %v1817
        %v1855 = vpop.xlane.xlu0 %1854
        %1856 = vadd.xlane.f32.xlu0 %v1818
        %v1857 = vpop.xlane.xlu0 %1856
        %1858 = vadd.xlane.f32.xlu0 %v1819
        %v1859 = vpop.xlane.xlu0 %1858
        %1860 = vadd.xlane.f32.xlu0 %v1820
        %v1861 = vpop.xlane.xlu0 %1860
        %1862 = vadd.xlane.f32.xlu0 %v1821
        %v1863 = vpop.xlane.xlu0 %1862
        %1864 = vadd.xlane.f32.xlu0 %v1822
        %v1865 = vpop.xlane.xlu0 %1864
        %1866 = vadd.xlane.f32.xlu0 %v1823
        %v1867 = vpop.xlane.xlu0 %1866
        %1868 = vadd.xlane.f32.xlu0 %v1824
        %v1869 = vpop.xlane.xlu0 %1868
        %1870 = vadd.xlane.f32.xlu0 %v1825
        %v1871 = vpop.xlane.xlu0 %1870
        %1872 = vadd.xlane.f32.xlu0 %v1826
        %v1873 = vpop.xlane.xlu0 %1872
        %1874 = vadd.xlane.f32.xlu0 %v1827
        %v1875 = vpop.xlane.xlu0 %1874
        %1876 = vadd.xlane.f32.xlu0 %v1828
        %v1877 = vpop.xlane.xlu0 %1876
        %1878 = vadd.xlane.f32.xlu0 %v1829
        %v1879 = vpop.xlane.xlu0 %1878
        %1880 = vadd.xlane.f32.xlu0 %v1830
        %v1881 = vpop.xlane.xlu0 %1880
        %1882 = vadd.xlane.f32.xlu0 %v1831
        %v1883 = vpop.xlane.xlu0 %1882
        %1884 = vadd.xlane.f32.xlu0 %v1832
        %v1885 = vpop.xlane.xlu0 %1884
        %1886 = vadd.xlane.f32.xlu0 %v1833
        %v1887 = vpop.xlane.xlu0 %1886
        %1888 = vadd.xlane.f32.xlu0 %v1834
        %v1889 = vpop.xlane.xlu0 %1888
        %1890 = vadd.xlane.f32.xlu0 %v1835
        %v1891 = vpop.xlane.xlu0 %1890
        %1892 = vadd.xlane.f32.xlu0 %v1836
        %v1893 = vpop.xlane.xlu0 %1892
        %1894 = vadd.xlane.f32.xlu0 %v1837
        %v1895 = vpop.xlane.xlu0 %1894
        %1896 = vadd.xlane.f32.xlu0 %v1838
        %v1897 = vpop.xlane.xlu0 %1896
        %1898 = vadd.xlane.f32.xlu0 %v1839
        %v1899 = vpop.xlane.xlu0 %1898
        %1900 = vadd.xlane.f32.xlu0 %v1840
        %v1901 = vpop.xlane.xlu0 %1900
        %1902 = vadd.xlane.f32.xlu0 %v1841
        %v1903 = vpop.xlane.xlu0 %1902
        %1904 = vadd.xlane.f32.xlu0 %v1842
        %v1905 = vpop.xlane.xlu0 %1904
        %1906 = vadd.xlane.f32.xlu0 %v1843
        %v1907 = vpop.xlane.xlu0 %1906
        %v1908 = vsub.f32 0.0, %v1845
        %v1909 = vsub.f32 0.0, %v1847
        %v1910 = vsub.f32 0.0, %v1849
        %v1911 = vsub.f32 0.0, %v1851
        %v1912 = vsub.f32 0.0, %v1853
        %v1913 = vsub.f32 0.0, %v1855
        %v1914 = vsub.f32 0.0, %v1857
        %v1915 = vsub.f32 0.0, %v1859
        %v1916 = vsub.f32 0.0, %v1861
        %v1917 = vsub.f32 0.0, %v1863
        %v1918 = vsub.f32 0.0, %v1865
        %v1919 = vsub.f32 0.0, %v1867
        %v1920 = vsub.f32 0.0, %v1869
        %v1921 = vsub.f32 0.0, %v1871
        %v1922 = vsub.f32 0.0, %v1873
        %v1923 = vsub.f32 0.0, %v1875
        %v1924 = vsub.f32 0.0, %v1877
        %v1925 = vsub.f32 0.0, %v1879
        %v1926 = vsub.f32 0.0, %v1881
        %v1927 = vsub.f32 0.0, %v1883
        %v1928 = vsub.f32 0.0, %v1885
        %v1929 = vsub.f32 0.0, %v1887
        %v1930 = vsub.f32 0.0, %v1889
        %v1931 = vsub.f32 0.0, %v1891
        %v1932 = vsub.f32 0.0, %v1893
        %v1933 = vsub.f32 0.0, %v1895
        %v1934 = vsub.f32 0.0, %v1897
        %v1935 = vsub.f32 0.0, %v1899
        %v1936 = vsub.f32 0.0, %v1901
        %v1937 = vsub.f32 0.0, %v1903
        %v1938 = vsub.f32 0.0, %v1905
        %v1939 = vsub.f32 0.0, %v1907
        %vm1940 = vcmask 64568
        %1941 = vst.msk [vmem:[%s213] sm:$0xff] %vm1940, %v1908
        %1942 = vst.msk [vmem:[%s213 + $0x8] sm:$0xff] %vm1940, %v1909
        %1943 = vst.msk [vmem:[%s213 + $0x10] sm:$0xff] %vm1940, %v1910
        %1944 = vst.msk [vmem:[%s213 + $0x18] sm:$0xff] %vm1940, %v1911
        %1945 = vst.msk [vmem:[%s213 + $0x20] sm:$0xff] %vm1940, %v1912
        %1946 = vst.msk [vmem:[%s213 + $0x28] sm:$0xff] %vm1940, %v1913
        %1947 = vst.msk [vmem:[%s213 + $0x30] sm:$0xff] %vm1940, %v1914
        %1948 = vst.msk [vmem:[%s213 + $0x38] sm:$0xff] %vm1940, %v1915
        %1949 = vst.msk [vmem:[%s213 + $0x40] sm:$0xff] %vm1940, %v1916
        %1950 = vst.msk [vmem:[%s213 + $0x48] sm:$0xff] %vm1940, %v1917
        %1951 = vst.msk [vmem:[%s213 + $0x50] sm:$0xff] %vm1940, %v1918
        %1952 = vst.msk [vmem:[%s213 + $0x58] sm:$0xff] %vm1940, %v1919
        %1953 = vst.msk [vmem:[%s213 + $0x60] sm:$0xff] %vm1940, %v1920
        %1954 = vst.msk [vmem:[%s213 + $0x68] sm:$0xff] %vm1940, %v1921
        %1955 = vst.msk [vmem:[%s213 + $0x70] sm:$0xff] %vm1940, %v1922
        %1956 = vst.msk [vmem:[%s213 + $0x78] sm:$0xff] %vm1940, %v1923
        %1957 = vst.msk [vmem:[%s213 + $0x80] sm:$0xff] %vm1940, %v1924
        %1958 = vst.msk [vmem:[%s213 + $0x88] sm:$0xff] %vm1940, %v1925
        %1959 = vst.msk [vmem:[%s213 + $0x90] sm:$0xff] %vm1940, %v1926
        %1960 = vst.msk [vmem:[%s213 + $0x98] sm:$0xff] %vm1940, %v1927
        %1961 = vst.msk [vmem:[%s213 + $0xa0] sm:$0xff] %vm1940, %v1928
        %1962 = vst.msk [vmem:[%s213 + $0xa8] sm:$0xff] %vm1940, %v1929
        %1963 = vst.msk [vmem:[%s213 + $0xb0] sm:$0xff] %vm1940, %v1930
        %1964 = vst.msk [vmem:[%s213 + $0xb8] sm:$0xff] %vm1940, %v1931
        %1965 = vst.msk [vmem:[%s213 + $0xc0] sm:$0xff] %vm1940, %v1932
        %1966 = vst.msk [vmem:[%s213 + $0xc8] sm:$0xff] %vm1940, %v1933
        %1967 = vst.msk [vmem:[%s213 + $0xd0] sm:$0xff] %vm1940, %v1934
        %1968 = vst.msk [vmem:[%s213 + $0xd8] sm:$0xff] %vm1940, %v1935
        %1969 = vst.msk [vmem:[%s213 + $0xe0] sm:$0xff] %vm1940, %v1936
        %1970 = vst.msk [vmem:[%s213 + $0xe8] sm:$0xff] %vm1940, %v1937
        %1971 = vst.msk [vmem:[%s213 + $0xf0] sm:$0xff] %vm1940, %v1938
        %1972 = vst.msk [vmem:[%s213 + $0xf8] sm:$0xff] %vm1940, %v1939
      $region43: #{adder2d_forward.1} parent=27 // pred_fallthru
        _
      %s1973 = smul.u32 32, %s18
      %p1974 = scmp.lt.s32.totalorder %s19, 0
      %s1975 = scalar_select %p1974, %s19, 0
      %p1976 = scmp.lt.s32.totalorder %s1973, 63
      %s1977 = scalar_select %p1976, %s1973, 63
      %s1978 = smul.addr %s1975, 64
      %s1979 = sadd.s32 %s1977, %s1978
      %s1980 = smul.addr %s1979, 8
      %s1981 = scalar_lea.vmem %s2, %s1980
      // Predicated region
      $region44: #{adder2d_forward.1} parent=27 // pred_check
        %p1982 = pneg %p108
      $region45: #{adder2d_forward.1} parent=27 // pred_check_branch
        %1984 = sbr.rel (%p1982) target = $region47
      $region46: #{adder2d_forward.1} parent=27 // pred_region
        %s1985 = smul.u32 32, %s18
      $region47: #{adder2d_forward.1} parent=27 // pred_fallthru
        _
    $region28: #{adder2d_forward.1} parent=5 // pred_fallthru
      _
    %p1986 = scmp.le.s32.totalorder 2, %s8
    // Predicated region
    $region48: #{adder2d_forward.1} parent=5 // pred_check
      %p1987 = pneg %p1986
    $region49: #{adder2d_forward.1} parent=5 // pred_check_branch
      %1989 = sbr.rel (%p1987) target = $region51
    $region50: #{adder2d_forward.1} parent=5 // pred_region
      %s1990 = ssub.s32 %s8, 2
      // Predicated region
      $region52: #{adder2d_forward.1} parent=50 // pred_check
        %p1991 = pneg %p114
      $region53: #{adder2d_forward.1} parent=50 // pred_check_branch
        %1993 = sbr.rel (%p1991) target = $region55
      $region54: #{adder2d_forward.1} parent=50 // pred_region
        %s1994 = smul.u32 32, %s21
        %p1995 = scmp.lt.s32.totalorder %s22, 0
        %s1996 = scalar_select %p1995, %s22, 0
        %p1997 = scmp.lt.s32.totalorder %s1994, 63
        %s1998 = scalar_select %p1997, %s1994, 63
        %s1999 = smul.addr %s1996, 64
        %s2000 = sadd.s32 %s1998, %s1999
        %s2001 = smul.addr %s2000, 8
        %s2002 = scalar_lea.vmem %s2, %s2001
      $region55: #{adder2d_forward.1} parent=50 // pred_fallthru
        _
    $region51: #{adder2d_forward.1} parent=5 // pred_fallthru
      _
  $region6: #{adder2d_forward.1} parent=0 // loop_footer
    %s12 = sadd.s32 1, %s8
  $region7: #{adder2d_forward.1} parent=0 // loop_footer_branch
    %7 = sbr.rel target = $region3
  $region8: #{adder2d_forward.1} parent=0 // loop_exit
    _

</llo_original>
